<compile_context>
chip_gen: v6e
topology: v6e:2x2x1
jax: 0.10.0
libtpu: 0.0.40
codegen_flags: <defaults>
</compile_context>

<pallas_src>
import jax
import jax.numpy as jnp
from jax.experimental import pallas as pl
from jax.experimental.pallas import tpu as pltpu

# ----- small synthetic shapes (stand-ins for hidden_size=768, seq=128, ...) --
B = 2            # batch
S = 8            # sequence length
H = 32           # hidden size
NUM_HEADS = 4
HEAD_DIM = H // NUM_HEADS
INTER = 64       # FFN intermediate size
VOCAB = 100
N_LAYERS = 2     # ALBERT shares one set of layer params across all layers
LN_EPS = 1e-12


def _layernorm(x, g, b):
    mu = jnp.mean(x, axis=-1, keepdims=True)
    var = jnp.mean((x - mu) ** 2, axis=-1, keepdims=True)
    return (x - mu) * jax.lax.rsqrt(var + LN_EPS) * g + b


# --------------------------- fused Pallas kernel ------------------------------
def fused_albert_kernel(x_emb_ref, attn_bias_ref,
                        wqkv_ref, wo_ref, w1_ref, w2_ref,
                        qkv_b_ref, vec_h_ref, b1_ref,
                        wp_ref, wc_ref, bc_ref,
                        logits_ref):
    """One grid step == one batch element: all shared-parameter encoder layers
    (in-kernel unrolled loop) + pooler + classifier head.

    vec_h rows: 0=bo 1=b2 2=ln1_g 3=ln1_b 4=ln2_g 5=ln2_b 6=bp.
    qkv_b / wqkv columns: [q(scaled by 1/sqrt(d)) | k | v]."""
    x0 = x_emb_ref[0]                 # [S, H] f32  (this batch element)
    attn_bias = attn_bias_ref[0]      # [1, S] f32  (hoisted key-position bias)

    def layer_body(_, x):
        xb = x.astype(jnp.bfloat16)   # MXU operands in bf16, f32 accumulation

        # ---- fused QKV projection: one lane-dense [S,H] @ [H,3H] matmul ----
        qkv = jnp.dot(xb, wqkv_ref[...],
                      preferred_element_type=jnp.float32) + qkv_b_ref[...]
        qkv_b16 = qkv.astype(jnp.bfloat16)          # cast once, slice per head

        # ---- attention core (score / softmax / context) per head ----
        # TODO(synk): at real shapes batch heads into one [NH,S,S] softmax pass.
        ctx_heads = []
        for n in range(NUM_HEADS):
            lo = n * HEAD_DIM
            q_h = qkv_b16[:, lo:lo + HEAD_DIM]
            k_h = qkv_b16[:, H + lo:H + lo + HEAD_DIM]
            v_h = qkv_b16[:, 2 * H + lo:2 * H + lo + HEAD_DIM]
            # 1/sqrt(head_dim) already folded into the q columns (wrapper).
            sc = jnp.einsum('qd,kd->qk', q_h, k_h,
                            preferred_element_type=jnp.float32) + attn_bias
            m = jnp.max(sc, axis=-1, keepdims=True)
            e = jnp.exp(sc - m)                         # f32 softmax
            p = e * pl.reciprocal(jnp.sum(e, axis=-1, keepdims=True),
                                  approx=True)
            ctx_heads.append(jnp.dot(p.astype(jnp.bfloat16), v_h,
                                     preferred_element_type=jnp.float32))
        # lane-contiguous [S, NH*HD] slab -> single output projection matmul
        ctx = jnp.concatenate(ctx_heads, axis=-1)       # [S, H] f32
        attn_out = jnp.dot(ctx.astype(jnp.bfloat16), wo_ref[...],
                           preferred_element_type=jnp.float32) + vec_h_ref[0]

        h1 = _layernorm(x + attn_out, vec_h_ref[2], vec_h_ref[3])

        # ---- FFN (tanh GELU == ALBERT gelu_new), 2-D matmuls ----
        ff = jnp.dot(h1.astype(jnp.bfloat16), w1_ref[...],
                     preferred_element_type=jnp.float32) + b1_ref[0]
        ff = jax.nn.gelu(ff, approximate=True)
        ff = jnp.dot(ff.astype(jnp.bfloat16), w2_ref[...],
                     preferred_element_type=jnp.float32) + vec_h_ref[1]

        return _layernorm(h1 + ff, vec_h_ref[4], vec_h_ref[5])

    # ALBERT: identical params every layer -> unrolled in-kernel loop.
    x_final = jax.lax.fori_loop(0, N_LAYERS, layer_body, x0, unroll=True)

    # ---- pooler (tanh dense on [CLS]) + dropout(identity at inference)
    #      + Linear(H, 1) head as a VPU lane reduction (no N=1 MXU matmul) ----
    cls = x_final[0:1, :]                                # [1, H]
    pooled = jnp.tanh(jnp.dot(cls.astype(jnp.bfloat16), wp_ref[...],
                              preferred_element_type=jnp.float32)
                      + vec_h_ref[6])
    logit = jnp.sum(pooled * wc_ref[...], axis=-1, keepdims=True) + bc_ref[...]
    logits_ref[0] = logit                                # [1, 1]


# --------------------------- wrapper ------------------------------------------
def _resident_spec(shape):
    """Whole-array block whose index is constant over the batch grid
    (DMA'd once, kept VMEM-resident)."""
    zeros = (0,) * len(shape)
    return pl.BlockSpec(shape, lambda b, _z=zeros: _z)


@jax.jit
def sentence_pair_classifier_forward(input_ids, attn_masks, token_type_ids,
                                     params):
    # ---- embeddings (plain-JAX glue: gathers) ----
    x = (params['word_emb'][input_ids]
         + params['pos_emb'][None, :, :]
         + params['type_emb'][token_type_ids])
    x = _layernorm(x, params['emb_ln_g'], params['emb_ln_b']).astype(jnp.float32)

    # hoisted attention bias over key positions: [B, 1, S]
    attn_bias = ((1.0 - attn_masks.astype(jnp.float32))
                 * jnp.float32(-1e4))[:, None, :]

    # fold 1/sqrt(head_dim) into the query projection (weight AND bias),
    # then fuse Q/K/V into one [H, 3H] weight (one lane-dense MXU matmul).
    inv_sqrt_d = 1.0 / jnp.sqrt(jnp.float32(HEAD_DIM))
    wqkv = jnp.concatenate(
        [params['wq'] * inv_sqrt_d, params['wk'], params['wv']],
        axis=1).astype(jnp.bfloat16)                               # [H, 3H]
    qkv_b = jnp.concatenate(
        [params['bq'] * inv_sqrt_d, params['bk'], params['bv']])[None, :]  # [1,3H]

    wo = params['wo'].astype(jnp.bfloat16)                         # [H, H]
    w1 = params['w1'].astype(jnp.bfloat16)                         # [H, INTER]
    w2 = params['w2'].astype(jnp.bfloat16)                         # [INTER, H]
    wp = params['wp'].astype(jnp.bfloat16)                         # [H, H]

    # pack the many tiny 1-D params into a few stacked refs
    vec_h = jnp.stack([params['bo'], params['b2'],
                       params['ln1_g'], params['ln1_b'],
                       params['ln2_g'], params['ln2_b'],
                       params['bp']], axis=0)                      # [7, H]
    b1 = params['b1'][None, :]                                     # [1, INTER]
    wc_row = params['wc'].T                                        # [1, H] f32
    bc = params['bc'][None, :]                                     # [1, 1] f32

    in_arrays = (x, attn_bias, wqkv, wo, w1, w2,
                 qkv_b, vec_h, b1, wp, wc_row, bc)

    in_specs = ([pl.BlockSpec((1, S, H), lambda b: (b, 0, 0)),
                 pl.BlockSpec((1, 1, S), lambda b: (b, 0, 0))]
                + [_resident_spec(a.shape) for a in in_arrays[2:]])

    grid_spec = pltpu.PrefetchScalarGridSpec(
        num_scalar_prefetch=0,
        grid=(B,),                                    # batch axis: megacore-parallel
        in_specs=in_specs,
        out_specs=pl.BlockSpec((1, 1, 1), lambda b: (b, 0, 0)),
    )
    logits3 = pl.pallas_call(
        fused_albert_kernel,
        out_shape=jax.ShapeDtypeStruct((B, 1, 1), jnp.float32),
        grid_spec=grid_spec,
        compiler_params=pltpu.CompilerParams(
            dimension_semantics=("parallel",),        # shard batch across TCs (v7x)
            vmem_limit_bytes=48 * 1024 * 1024),       # explicit (v5e default is 16 MiB)
    )(*in_arrays)
    return logits3.reshape(B, 1)                      # matches cls_layer output [B,1]


# --------------------------- parameter init -----------------------------------
def init_params(key):
    keys = iter(jax.random.split(key, 16))

    def nrm(shape):
        return 0.02 * jax.random.normal(next(keys), shape, dtype=jnp.float32)

    ones = lambda s: jnp.ones(s, jnp.float32)
    zeros = lambda s: jnp.zeros(s, jnp.float32)
    return {
        'word_emb': nrm((VOCAB, H)),
        'pos_emb':  nrm((S, H)),
        'type_emb': nrm((2, H)),
        'emb_ln_g': ones((H,)), 'emb_ln_b': zeros((H,)),
        'wq': nrm((H, H)), 'bq': zeros((H,)),
        'wk': nrm((H, H)), 'bk': zeros((H,)),
        'wv': nrm((H, H)), 'bv': zeros((H,)),
        'wo': nrm((H, H)), 'bo': zeros((H,)),
        'ln1_g': ones((H,)), 'ln1_b': zeros((H,)),
        'w1': nrm((H, INTER)), 'b1': zeros((INTER,)),
        'w2': nrm((INTER, H)), 'b2': zeros((H,)),
        'ln2_g': ones((H,)), 'ln2_b': zeros((H,)),
        'wp': nrm((H, H)), 'bp': zeros((H,)),      # pooler dense
        'wc': nrm((H, 1)), 'bc': zeros((1,)),      # cls_layer = Linear(H, 1)
    }


if __name__ == "__main__":
    root = jax.random.PRNGKey(0)
    pkey, ikey = jax.random.split(root, 2)
    params = init_params(pkey)

    input_ids = jax.random.randint(ikey, (B, S), 0, VOCAB, dtype=jnp.int32)
    attn_masks = jnp.ones((B, S), dtype=jnp.int32)
    token_type_ids = jnp.broadcast_to(
        (jnp.arange(S)[None, :] >= (S // 2)).astype(jnp.int32), (B, S))

    logits = sentence_pair_classifier_forward(
        input_ids, attn_masks, token_type_ids, params)
    jax.block_until_ready(logits)
    assert logits.shape == (B, 1) and logits.dtype == jnp.float32
    print("KERNEL_OK")
</pallas_src>

<mosaic_0001>
module attributes {stable_mosaic.version = 11 : i64} {
  func.func @fused_albert_kernel(%arg0: i32, %arg1: memref<1x8x32xf32, #tpu.memory_space<vmem>>, %arg2: memref<1x1x8xf32, #tpu.memory_space<vmem>>, %arg3: memref<32x96xbf16, #tpu.memory_space<vmem>>, %arg4: memref<32x32xbf16, #tpu.memory_space<vmem>>, %arg5: memref<32x64xbf16, #tpu.memory_space<vmem>>, %arg6: memref<64x32xbf16, #tpu.memory_space<vmem>>, %arg7: memref<1x96xf32, #tpu.memory_space<vmem>>, %arg8: memref<7x32xf32, #tpu.memory_space<vmem>>, %arg9: memref<1x64xf32, #tpu.memory_space<vmem>>, %arg10: memref<32x32xbf16, #tpu.memory_space<vmem>>, %arg11: memref<1x32xf32, #tpu.memory_space<vmem>>, %arg12: memref<1x1xf32, #tpu.memory_space<vmem>>, %arg13: memref<1x1x1xf32, #tpu.memory_space<vmem>>) attributes {dimension_semantics = [#tpu.dimension_semantics<parallel>], iteration_bounds = array<i64: 2>, scalar_prefetch = 0 : i64, scratch_operands = 0 : i64, tpu.core_type = #tpu.core_type<tc>, window_params = [{transform_indices = @transform_0, window_bounds = array<i64: 1, 8, 32>}, {transform_indices = @transform_1, window_bounds = array<i64: 1, 1, 8>}, {pipeline_mode = #tpu.pipeline_mode<synchronous>, transform_indices = @transform_2, window_bounds = array<i64: 32, 96>}, {pipeline_mode = #tpu.pipeline_mode<synchronous>, transform_indices = @transform_3, window_bounds = array<i64: 32, 32>}, {pipeline_mode = #tpu.pipeline_mode<synchronous>, transform_indices = @transform_4, window_bounds = array<i64: 32, 64>}, {pipeline_mode = #tpu.pipeline_mode<synchronous>, transform_indices = @transform_5, window_bounds = array<i64: 64, 32>}, {pipeline_mode = #tpu.pipeline_mode<synchronous>, transform_indices = @transform_6, window_bounds = array<i64: 1, 96>}, {pipeline_mode = #tpu.pipeline_mode<synchronous>, transform_indices = @transform_7, window_bounds = array<i64: 7, 32>}, {pipeline_mode = #tpu.pipeline_mode<synchronous>, transform_indices = @transform_8, window_bounds = array<i64: 1, 64>}, {pipeline_mode = #tpu.pipeline_mode<synchronous>, transform_indices = @transform_9, window_bounds = array<i64: 32, 32>}, {pipeline_mode = #tpu.pipeline_mode<synchronous>, transform_indices = @transform_10, window_bounds = array<i64: 1, 32>}, {pipeline_mode = #tpu.pipeline_mode<synchronous>, transform_indices = @transform_11, window_bounds = array<i64: 1, 1>}, {transform_indices = @transform_12, window_bounds = array<i64: 1, 1, 1>}]} {
    %c0 = arith.constant 0 : index
    %c0_0 = arith.constant 0 : index
    %c0_1 = arith.constant 0 : index
    %0 = vector.load %arg1[%c0, %c0_0, %c0_1] : memref<1x8x32xf32, #tpu.memory_space<vmem>>, vector<1x8x32xf32>
    %1 = vector.shape_cast %0 : vector<1x8x32xf32> to vector<8x32xf32>
    %c0_2 = arith.constant 0 : index
    %c0_3 = arith.constant 0 : index
    %c0_4 = arith.constant 0 : index
    %2 = vector.load %arg2[%c0_2, %c0_3, %c0_4] : memref<1x1x8xf32, #tpu.memory_space<vmem>>, vector<1x1x8xf32>
    %3 = vector.shape_cast %2 : vector<1x1x8xf32> to vector<1x8xf32>
    %c0_i32 = arith.constant 0 : i32
    %4 = arith.truncf %1 : vector<8x32xf32> to vector<8x32xbf16>
    %c0_5 = arith.constant 0 : index
    %c0_6 = arith.constant 0 : index
    %5 = vector.load %arg3[%c0_5, %c0_6] : memref<32x96xbf16, #tpu.memory_space<vmem>>, vector<32x96xbf16>
    %cst = arith.constant dense<0.000000e+00> : vector<8x96xf32>
    %6 = tpu.matmul %4, %5, %cst {dimension_numbers = #tpu.dot_dimension_numbers<[1], [0], [0], [1], [0, 0, 1, 1], [], []>} : vector<8x32xbf16>, vector<32x96xbf16>, vector<8x96xf32> -> vector<8x96xf32>
    %c0_7 = arith.constant 0 : index
    %c0_8 = arith.constant 0 : index
    %7 = vector.load %arg7[%c0_7, %c0_8] : memref<1x96xf32, #tpu.memory_space<vmem>>, vector<1x96xf32>
    %8 = vector.broadcast %7 : vector<1x96xf32> to vector<8x96xf32>
    %9 = arith.addf %6, %8 : vector<8x96xf32>
    %10 = arith.truncf %9 : vector<8x96xf32> to vector<8x96xbf16>
    %11 = vector.extract_strided_slice %10 {offsets = [0, 0], sizes = [8, 8], strides = [1, 1]} : vector<8x96xbf16> to vector<8x8xbf16>
    %12 = vector.extract_strided_slice %10 {offsets = [0, 32], sizes = [8, 8], strides = [1, 1]} : vector<8x96xbf16> to vector<8x8xbf16>
    %13 = vector.extract_strided_slice %10 {offsets = [0, 64], sizes = [8, 8], strides = [1, 1]} : vector<8x96xbf16> to vector<8x8xbf16>
    "tpu.trace_start"() <{level = 10 : i32, message = "qd,kd->qk"}> : () -> ()
    %cst_9 = arith.constant dense<0.000000e+00> : vector<8x8xf32>
    %14 = tpu.matmul %11, %12, %cst_9 {dimension_numbers = #tpu.dot_dimension_numbers<[1], [1], [0], [0], [0, 0, 1, 0], [], []>} : vector<8x8xbf16>, vector<8x8xbf16>, vector<8x8xf32> -> vector<8x8xf32>
    "tpu.trace_stop"() : () -> ()
    %15 = vector.broadcast %3 : vector<1x8xf32> to vector<8x8xf32>
    %16 = arith.addf %14, %15 : vector<8x8xf32>
    %cst_10 = arith.constant dense<0xFF800000> : vector<8xf32>
    %17 = vector.multi_reduction <maximumf>, %16, %cst_10 [1] : vector<8x8xf32> to vector<8xf32>
    %18 = vector.shape_cast %17 : vector<8xf32> to vector<8x1xf32>
    %19 = vector.broadcast %18 : vector<8x1xf32> to vector<8x8xf32>
    %20 = arith.subf %16, %19 : vector<8x8xf32>
    %21 = math.exp %20 : vector<8x8xf32>
    %cst_11 = arith.constant dense<0.000000e+00> : vector<8xf32>
    %22 = vector.multi_reduction <add>, %21, %cst_11 [1] : vector<8x8xf32> to vector<8xf32>
    %23 = vector.shape_cast %22 : vector<8xf32> to vector<8x1xf32>
    %24 = tpu.reciprocal %23 {approx = true} : vector<8x1xf32> -> vector<8x1xf32>
    %25 = vector.broadcast %24 : vector<8x1xf32> to vector<8x8xf32>
    %26 = arith.mulf %21, %25 : vector<8x8xf32>
    %27 = arith.truncf %26 : vector<8x8xf32> to vector<8x8xbf16>
    %cst_12 = arith.constant dense<0.000000e+00> : vector<8x8xf32>
    %28 = tpu.matmul %27, %13, %cst_12 {dimension_numbers = #tpu.dot_dimension_numbers<[1], [0], [0], [1], [0, 0, 1, 1], [], []>} : vector<8x8xbf16>, vector<8x8xbf16>, vector<8x8xf32> -> vector<8x8xf32>
    %29 = vector.extract_strided_slice %10 {offsets = [0, 8], sizes = [8, 8], strides = [1, 1]} : vector<8x96xbf16> to vector<8x8xbf16>
    %30 = vector.extract_strided_slice %10 {offsets = [0, 40], sizes = [8, 8], strides = [1, 1]} : vector<8x96xbf16> to vector<8x8xbf16>
    %31 = vector.extract_strided_slice %10 {offsets = [0, 72], sizes = [8, 8], strides = [1, 1]} : vector<8x96xbf16> to vector<8x8xbf16>
    "tpu.trace_start"() <{level = 10 : i32, message = "qd,kd->qk"}> : () -> ()
    %cst_13 = arith.constant dense<0.000000e+00> : vector<8x8xf32>
    %32 = tpu.matmul %29, %30, %cst_13 {dimension_numbers = #tpu.dot_dimension_numbers<[1], [1], [0], [0], [0, 0, 1, 0], [], []>} : vector<8x8xbf16>, vector<8x8xbf16>, vector<8x8xf32> -> vector<8x8xf32>
    "tpu.trace_stop"() : () -> ()
    %33 = vector.broadcast %3 : vector<1x8xf32> to vector<8x8xf32>
    %34 = arith.addf %32, %33 : vector<8x8xf32>
    %cst_14 = arith.constant dense<0xFF800000> : vector<8xf32>
    %35 = vector.multi_reduction <maximumf>, %34, %cst_14 [1] : vector<8x8xf32> to vector<8xf32>
    %36 = vector.shape_cast %35 : vector<8xf32> to vector<8x1xf32>
    %37 = vector.broadcast %36 : vector<8x1xf32> to vector<8x8xf32>
    %38 = arith.subf %34, %37 : vector<8x8xf32>
    %39 = math.exp %38 : vector<8x8xf32>
    %cst_15 = arith.constant dense<0.000000e+00> : vector<8xf32>
    %40 = vector.multi_reduction <add>, %39, %cst_15 [1] : vector<8x8xf32> to vector<8xf32>
    %41 = vector.shape_cast %40 : vector<8xf32> to vector<8x1xf32>
    %42 = tpu.reciprocal %41 {approx = true} : vector<8x1xf32> -> vector<8x1xf32>
    %43 = vector.broadcast %42 : vector<8x1xf32> to vector<8x8xf32>
    %44 = arith.mulf %39, %43 : vector<8x8xf32>
    %45 = arith.truncf %44 : vector<8x8xf32> to vector<8x8xbf16>
    %cst_16 = arith.constant dense<0.000000e+00> : vector<8x8xf32>
    %46 = tpu.matmul %45, %31, %cst_16 {dimension_numbers = #tpu.dot_dimension_numbers<[1], [0], [0], [1], [0, 0, 1, 1], [], []>} : vector<8x8xbf16>, vector<8x8xbf16>, vector<8x8xf32> -> vector<8x8xf32>
    %47 = vector.extract_strided_slice %10 {offsets = [0, 16], sizes = [8, 8], strides = [1, 1]} : vector<8x96xbf16> to vector<8x8xbf16>
    %48 = vector.extract_strided_slice %10 {offsets = [0, 48], sizes = [8, 8], strides = [1, 1]} : vector<8x96xbf16> to vector<8x8xbf16>
    %49 = vector.extract_strided_slice %10 {offsets = [0, 80], sizes = [8, 8], strides = [1, 1]} : vector<8x96xbf16> to vector<8x8xbf16>
    "tpu.trace_start"() <{level = 10 : i32, message = "qd,kd->qk"}> : () -> ()
    %cst_17 = arith.constant dense<0.000000e+00> : vector<8x8xf32>
    %50 = tpu.matmul %47, %48, %cst_17 {dimension_numbers = #tpu.dot_dimension_numbers<[1], [1], [0], [0], [0, 0, 1, 0], [], []>} : vector<8x8xbf16>, vector<8x8xbf16>, vector<8x8xf32> -> vector<8x8xf32>
    "tpu.trace_stop"() : () -> ()
    %51 = vector.broadcast %3 : vector<1x8xf32> to vector<8x8xf32>
    %52 = arith.addf %50, %51 : vector<8x8xf32>
    %cst_18 = arith.constant dense<0xFF800000> : vector<8xf32>
    %53 = vector.multi_reduction <maximumf>, %52, %cst_18 [1] : vector<8x8xf32> to vector<8xf32>
    %54 = vector.shape_cast %53 : vector<8xf32> to vector<8x1xf32>
    %55 = vector.broadcast %54 : vector<8x1xf32> to vector<8x8xf32>
    %56 = arith.subf %52, %55 : vector<8x8xf32>
    %57 = math.exp %56 : vector<8x8xf32>
    %cst_19 = arith.constant dense<0.000000e+00> : vector<8xf32>
    %58 = vector.multi_reduction <add>, %57, %cst_19 [1] : vector<8x8xf32> to vector<8xf32>
    %59 = vector.shape_cast %58 : vector<8xf32> to vector<8x1xf32>
    %60 = tpu.reciprocal %59 {approx = true} : vector<8x1xf32> -> vector<8x1xf32>
    %61 = vector.broadcast %60 : vector<8x1xf32> to vector<8x8xf32>
    %62 = arith.mulf %57, %61 : vector<8x8xf32>
    %63 = arith.truncf %62 : vector<8x8xf32> to vector<8x8xbf16>
    %cst_20 = arith.constant dense<0.000000e+00> : vector<8x8xf32>
    %64 = tpu.matmul %63, %49, %cst_20 {dimension_numbers = #tpu.dot_dimension_numbers<[1], [0], [0], [1], [0, 0, 1, 1], [], []>} : vector<8x8xbf16>, vector<8x8xbf16>, vector<8x8xf32> -> vector<8x8xf32>
    %65 = vector.extract_strided_slice %10 {offsets = [0, 24], sizes = [8, 8], strides = [1, 1]} : vector<8x96xbf16> to vector<8x8xbf16>
    %66 = vector.extract_strided_slice %10 {offsets = [0, 56], sizes = [8, 8], strides = [1, 1]} : vector<8x96xbf16> to vector<8x8xbf16>
    %67 = vector.extract_strided_slice %10 {offsets = [0, 88], sizes = [8, 8], strides = [1, 1]} : vector<8x96xbf16> to vector<8x8xbf16>
    "tpu.trace_start"() <{level = 10 : i32, message = "qd,kd->qk"}> : () -> ()
    %cst_21 = arith.constant dense<0.000000e+00> : vector<8x8xf32>
    %68 = tpu.matmul %65, %66, %cst_21 {dimension_numbers = #tpu.dot_dimension_numbers<[1], [1], [0], [0], [0, 0, 1, 0], [], []>} : vector<8x8xbf16>, vector<8x8xbf16>, vector<8x8xf32> -> vector<8x8xf32>
    "tpu.trace_stop"() : () -> ()
    %69 = vector.broadcast %3 : vector<1x8xf32> to vector<8x8xf32>
    %70 = arith.addf %68, %69 : vector<8x8xf32>
    %cst_22 = arith.constant dense<0xFF800000> : vector<8xf32>
    %71 = vector.multi_reduction <maximumf>, %70, %cst_22 [1] : vector<8x8xf32> to vector<8xf32>
    %72 = vector.shape_cast %71 : vector<8xf32> to vector<8x1xf32>
    %73 = vector.broadcast %72 : vector<8x1xf32> to vector<8x8xf32>
    %74 = arith.subf %70, %73 : vector<8x8xf32>
    %75 = math.exp %74 : vector<8x8xf32>
    %cst_23 = arith.constant dense<0.000000e+00> : vector<8xf32>
    %76 = vector.multi_reduction <add>, %75, %cst_23 [1] : vector<8x8xf32> to vector<8xf32>
    %77 = vector.shape_cast %76 : vector<8xf32> to vector<8x1xf32>
    %78 = tpu.reciprocal %77 {approx = true} : vector<8x1xf32> -> vector<8x1xf32>
    %79 = vector.broadcast %78 : vector<8x1xf32> to vector<8x8xf32>
    %80 = arith.mulf %75, %79 : vector<8x8xf32>
    %81 = arith.truncf %80 : vector<8x8xf32> to vector<8x8xbf16>
    %cst_24 = arith.constant dense<0.000000e+00> : vector<8x8xf32>
    %82 = tpu.matmul %81, %67, %cst_24 {dimension_numbers = #tpu.dot_dimension_numbers<[1], [0], [0], [1], [0, 0, 1, 1], [], []>} : vector<8x8xbf16>, vector<8x8xbf16>, vector<8x8xf32> -> vector<8x8xf32>
    %83 = tpu.concatenate %28, %46, %64, %82 in 1 : vector<8x8xf32>, vector<8x8xf32>, vector<8x8xf32>, vector<8x8xf32> -> vector<8x32xf32>
    %84 = arith.truncf %83 : vector<8x32xf32> to vector<8x32xbf16>
    %c0_25 = arith.constant 0 : index
    %c0_26 = arith.constant 0 : index
    %85 = vector.load %arg4[%c0_25, %c0_26] : memref<32x32xbf16, #tpu.memory_space<vmem>>, vector<32x32xbf16>
    %cst_27 = arith.constant dense<0.000000e+00> : vector<8x32xf32>
    %86 = tpu.matmul %84, %85, %cst_27 {dimension_numbers = #tpu.dot_dimension_numbers<[1], [0], [0], [1], [0, 0, 1, 1], [], []>} : vector<8x32xbf16>, vector<32x32xbf16>, vector<8x32xf32> -> vector<8x32xf32>
    %c0_28 = arith.constant 0 : index
    %c0_29 = arith.constant 0 : index
    %87 = vector.load %arg8[%c0_28, %c0_29] : memref<7x32xf32, #tpu.memory_space<vmem>>, vector<1x32xf32>
    %88 = vector.shape_cast %87 : vector<1x32xf32> to vector<32xf32>
    %89 = vector.shape_cast %88 : vector<32xf32> to vector<1x32xf32>
    %90 = vector.broadcast %89 : vector<1x32xf32> to vector<8x32xf32>
    %91 = arith.addf %86, %90 : vector<8x32xf32>
    %92 = arith.addf %1, %91 : vector<8x32xf32>
    %c2 = arith.constant 2 : index
    %c0_30 = arith.constant 0 : index
    %93 = vector.load %arg8[%c2, %c0_30] : memref<7x32xf32, #tpu.memory_space<vmem>>, vector<1x32xf32>
    %94 = vector.shape_cast %93 : vector<1x32xf32> to vector<32xf32>
    %c3 = arith.constant 3 : index
    %c0_31 = arith.constant 0 : index
    %95 = vector.load %arg8[%c3, %c0_31] : memref<7x32xf32, #tpu.memory_space<vmem>>, vector<1x32xf32>
    %96 = vector.shape_cast %95 : vector<1x32xf32> to vector<32xf32>
    %cst_32 = arith.constant dense<0.000000e+00> : vector<8xf32>
    %97 = vector.multi_reduction <add>, %92, %cst_32 [1] : vector<8x32xf32> to vector<8xf32>
    %98 = vector.shape_cast %97 : vector<8xf32> to vector<8x1xf32>
    %cst_33 = arith.constant 3.200000e+01 : f32
    %99 = vector.broadcast %cst_33 : f32 to vector<8x1xf32>
    %100 = arith.divf %98, %99 : vector<8x1xf32>
    %101 = vector.broadcast %100 : vector<8x1xf32> to vector<8x32xf32>
    %102 = arith.subf %92, %101 : vector<8x32xf32>
    %103 = arith.mulf %102, %102 : vector<8x32xf32>
    %cst_34 = arith.constant dense<0.000000e+00> : vector<8xf32>
    %104 = vector.multi_reduction <add>, %103, %cst_34 [1] : vector<8x32xf32> to vector<8xf32>
    %105 = vector.shape_cast %104 : vector<8xf32> to vector<8x1xf32>
    %cst_35 = arith.constant 3.200000e+01 : f32
    %106 = vector.broadcast %cst_35 : f32 to vector<8x1xf32>
    %107 = arith.divf %105, %106 : vector<8x1xf32>
    %108 = vector.broadcast %100 : vector<8x1xf32> to vector<8x32xf32>
    %109 = arith.subf %92, %108 : vector<8x32xf32>
    %cst_36 = arith.constant 9.99999996E-13 : f32
    %110 = vector.broadcast %cst_36 : f32 to vector<8x1xf32>
    %111 = arith.addf %107, %110 : vector<8x1xf32>
    %112 = math.rsqrt %111 : vector<8x1xf32>
    %113 = vector.broadcast %112 : vector<8x1xf32> to vector<8x32xf32>
    %114 = arith.mulf %109, %113 : vector<8x32xf32>
    %115 = vector.shape_cast %94 : vector<32xf32> to vector<1x32xf32>
    %116 = vector.broadcast %115 : vector<1x32xf32> to vector<8x32xf32>
    %117 = arith.mulf %114, %116 : vector<8x32xf32>
    %118 = vector.shape_cast %96 : vector<32xf32> to vector<1x32xf32>
    %119 = vector.broadcast %118 : vector<1x32xf32> to vector<8x32xf32>
    %120 = arith.addf %117, %119 : vector<8x32xf32>
    %121 = arith.truncf %120 : vector<8x32xf32> to vector<8x32xbf16>
    %c0_37 = arith.constant 0 : index
    %c0_38 = arith.constant 0 : index
    %122 = vector.load %arg5[%c0_37, %c0_38] : memref<32x64xbf16, #tpu.memory_space<vmem>>, vector<32x64xbf16>
    %cst_39 = arith.constant dense<0.000000e+00> : vector<8x64xf32>
    %123 = tpu.matmul %121, %122, %cst_39 {dimension_numbers = #tpu.dot_dimension_numbers<[1], [0], [0], [1], [0, 0, 1, 1], [], []>} : vector<8x32xbf16>, vector<32x64xbf16>, vector<8x64xf32> -> vector<8x64xf32>
    %c0_40 = arith.constant 0 : index
    %c0_41 = arith.constant 0 : index
    %124 = vector.load %arg9[%c0_40, %c0_41] : memref<1x64xf32, #tpu.memory_space<vmem>>, vector<1x64xf32>
    %125 = vector.shape_cast %124 : vector<1x64xf32> to vector<64xf32>
    %126 = vector.shape_cast %125 : vector<64xf32> to vector<1x64xf32>
    %127 = vector.broadcast %126 : vector<1x64xf32> to vector<8x64xf32>
    %128 = arith.addf %123, %127 : vector<8x64xf32>
    %129 = arith.mulf %128, %128 : vector<8x64xf32>
    %130 = arith.mulf %128, %129 : vector<8x64xf32>
    %cst_42 = arith.constant 4.471500e-02 : f32
    %131 = vector.broadcast %cst_42 : f32 to vector<8x64xf32>
    %132 = arith.mulf %131, %130 : vector<8x64xf32>
    %133 = arith.addf %128, %132 : vector<8x64xf32>
    %cst_43 = arith.constant 0.797884583 : f32
    %134 = vector.broadcast %cst_43 : f32 to vector<8x64xf32>
    %135 = arith.mulf %134, %133 : vector<8x64xf32>
    %136 = math.tanh %135 : vector<8x64xf32>
    %cst_44 = arith.constant 1.000000e+00 : f32
    %137 = vector.broadcast %cst_44 : f32 to vector<8x64xf32>
    %138 = arith.addf %137, %136 : vector<8x64xf32>
    %cst_45 = arith.constant 5.000000e-01 : f32
    %139 = vector.broadcast %cst_45 : f32 to vector<8x64xf32>
    %140 = arith.mulf %139, %138 : vector<8x64xf32>
    %141 = arith.mulf %128, %140 : vector<8x64xf32>
    %142 = arith.truncf %141 : vector<8x64xf32> to vector<8x64xbf16>
    %c0_46 = arith.constant 0 : index
    %c0_47 = arith.constant 0 : index
    %143 = vector.load %arg6[%c0_46, %c0_47] : memref<64x32xbf16, #tpu.memory_space<vmem>>, vector<64x32xbf16>
    %cst_48 = arith.constant dense<0.000000e+00> : vector<8x32xf32>
    %144 = tpu.matmul %142, %143, %cst_48 {dimension_numbers = #tpu.dot_dimension_numbers<[1], [0], [0], [1], [0, 0, 1, 1], [], []>} : vector<8x64xbf16>, vector<64x32xbf16>, vector<8x32xf32> -> vector<8x32xf32>
    %c1 = arith.constant 1 : index
    %c0_49 = arith.constant 0 : index
    %145 = vector.load %arg8[%c1, %c0_49] : memref<7x32xf32, #tpu.memory_space<vmem>>, vector<1x32xf32>
    %146 = vector.shape_cast %145 : vector<1x32xf32> to vector<32xf32>
    %147 = vector.shape_cast %146 : vector<32xf32> to vector<1x32xf32>
    %148 = vector.broadcast %147 : vector<1x32xf32> to vector<8x32xf32>
    %149 = arith.addf %144, %148 : vector<8x32xf32>
    %150 = arith.addf %120, %149 : vector<8x32xf32>
    %c4 = arith.constant 4 : index
    %c0_50 = arith.constant 0 : index
    %151 = vector.load %arg8[%c4, %c0_50] : memref<7x32xf32, #tpu.memory_space<vmem>>, vector<1x32xf32>
    %152 = vector.shape_cast %151 : vector<1x32xf32> to vector<32xf32>
    %c5 = arith.constant 5 : index
    %c0_51 = arith.constant 0 : index
    %153 = vector.load %arg8[%c5, %c0_51] : memref<7x32xf32, #tpu.memory_space<vmem>>, vector<1x32xf32>
    %154 = vector.shape_cast %153 : vector<1x32xf32> to vector<32xf32>
    %cst_52 = arith.constant dense<0.000000e+00> : vector<8xf32>
    %155 = vector.multi_reduction <add>, %150, %cst_52 [1] : vector<8x32xf32> to vector<8xf32>
    %156 = vector.shape_cast %155 : vector<8xf32> to vector<8x1xf32>
    %cst_53 = arith.constant 3.200000e+01 : f32
    %157 = vector.broadcast %cst_53 : f32 to vector<8x1xf32>
    %158 = arith.divf %156, %157 : vector<8x1xf32>
    %159 = vector.broadcast %158 : vector<8x1xf32> to vector<8x32xf32>
    %160 = arith.subf %150, %159 : vector<8x32xf32>
    %161 = arith.mulf %160, %160 : vector<8x32xf32>
    %cst_54 = arith.constant dense<0.000000e+00> : vector<8xf32>
    %162 = vector.multi_reduction <add>, %161, %cst_54 [1] : vector<8x32xf32> to vector<8xf32>
    %163 = vector.shape_cast %162 : vector<8xf32> to vector<8x1xf32>
    %cst_55 = arith.constant 3.200000e+01 : f32
    %164 = vector.broadcast %cst_55 : f32 to vector<8x1xf32>
    %165 = arith.divf %163, %164 : vector<8x1xf32>
    %166 = vector.broadcast %158 : vector<8x1xf32> to vector<8x32xf32>
    %167 = arith.subf %150, %166 : vector<8x32xf32>
    %cst_56 = arith.constant 9.99999996E-13 : f32
    %168 = vector.broadcast %cst_56 : f32 to vector<8x1xf32>
    %169 = arith.addf %165, %168 : vector<8x1xf32>
    %170 = math.rsqrt %169 : vector<8x1xf32>
    %171 = vector.broadcast %170 : vector<8x1xf32> to vector<8x32xf32>
    %172 = arith.mulf %167, %171 : vector<8x32xf32>
    %173 = vector.shape_cast %152 : vector<32xf32> to vector<1x32xf32>
    %174 = vector.broadcast %173 : vector<1x32xf32> to vector<8x32xf32>
    %175 = arith.mulf %172, %174 : vector<8x32xf32>
    %176 = vector.shape_cast %154 : vector<32xf32> to vector<1x32xf32>
    %177 = vector.broadcast %176 : vector<1x32xf32> to vector<8x32xf32>
    %178 = arith.addf %175, %177 : vector<8x32xf32>
    %c1_i32 = arith.constant 1 : i32
    %179 = arith.truncf %178 : vector<8x32xf32> to vector<8x32xbf16>
    %c0_57 = arith.constant 0 : index
    %c0_58 = arith.constant 0 : index
    %180 = vector.load %arg3[%c0_57, %c0_58] : memref<32x96xbf16, #tpu.memory_space<vmem>>, vector<32x96xbf16>
    %cst_59 = arith.constant dense<0.000000e+00> : vector<8x96xf32>
    %181 = tpu.matmul %179, %180, %cst_59 {dimension_numbers = #tpu.dot_dimension_numbers<[1], [0], [0], [1], [0, 0, 1, 1], [], []>} : vector<8x32xbf16>, vector<32x96xbf16>, vector<8x96xf32> -> vector<8x96xf32>
    %c0_60 = arith.constant 0 : index
    %c0_61 = arith.constant 0 : index
    %182 = vector.load %arg7[%c0_60, %c0_61] : memref<1x96xf32, #tpu.memory_space<vmem>>, vector<1x96xf32>
    %183 = vector.broadcast %182 : vector<1x96xf32> to vector<8x96xf32>
    %184 = arith.addf %181, %183 : vector<8x96xf32>
    %185 = arith.truncf %184 : vector<8x96xf32> to vector<8x96xbf16>
    %186 = vector.extract_strided_slice %185 {offsets = [0, 0], sizes = [8, 8], strides = [1, 1]} : vector<8x96xbf16> to vector<8x8xbf16>
    %187 = vector.extract_strided_slice %185 {offsets = [0, 32], sizes = [8, 8], strides = [1, 1]} : vector<8x96xbf16> to vector<8x8xbf16>
    %188 = vector.extract_strided_slice %185 {offsets = [0, 64], sizes = [8, 8], strides = [1, 1]} : vector<8x96xbf16> to vector<8x8xbf16>
    "tpu.trace_start"() <{level = 10 : i32, message = "qd,kd->qk"}> : () -> ()
    %cst_62 = arith.constant dense<0.000000e+00> : vector<8x8xf32>
    %189 = tpu.matmul %186, %187, %cst_62 {dimension_numbers = #tpu.dot_dimension_numbers<[1], [1], [0], [0], [0, 0, 1, 0], [], []>} : vector<8x8xbf16>, vector<8x8xbf16>, vector<8x8xf32> -> vector<8x8xf32>
    "tpu.trace_stop"() : () -> ()
    %190 = vector.broadcast %3 : vector<1x8xf32> to vector<8x8xf32>
    %191 = arith.addf %189, %190 : vector<8x8xf32>
    %cst_63 = arith.constant dense<0xFF800000> : vector<8xf32>
    %192 = vector.multi_reduction <maximumf>, %191, %cst_63 [1] : vector<8x8xf32> to vector<8xf32>
    %193 = vector.shape_cast %192 : vector<8xf32> to vector<8x1xf32>
    %194 = vector.broadcast %193 : vector<8x1xf32> to vector<8x8xf32>
    %195 = arith.subf %191, %194 : vector<8x8xf32>
    %196 = math.exp %195 : vector<8x8xf32>
    %cst_64 = arith.constant dense<0.000000e+00> : vector<8xf32>
    %197 = vector.multi_reduction <add>, %196, %cst_64 [1] : vector<8x8xf32> to vector<8xf32>
    %198 = vector.shape_cast %197 : vector<8xf32> to vector<8x1xf32>
    %199 = tpu.reciprocal %198 {approx = true} : vector<8x1xf32> -> vector<8x1xf32>
    %200 = vector.broadcast %199 : vector<8x1xf32> to vector<8x8xf32>
    %201 = arith.mulf %196, %200 : vector<8x8xf32>
    %202 = arith.truncf %201 : vector<8x8xf32> to vector<8x8xbf16>
    %cst_65 = arith.constant dense<0.000000e+00> : vector<8x8xf32>
    %203 = tpu.matmul %202, %188, %cst_65 {dimension_numbers = #tpu.dot_dimension_numbers<[1], [0], [0], [1], [0, 0, 1, 1], [], []>} : vector<8x8xbf16>, vector<8x8xbf16>, vector<8x8xf32> -> vector<8x8xf32>
    %204 = vector.extract_strided_slice %185 {offsets = [0, 8], sizes = [8, 8], strides = [1, 1]} : vector<8x96xbf16> to vector<8x8xbf16>
    %205 = vector.extract_strided_slice %185 {offsets = [0, 40], sizes = [8, 8], strides = [1, 1]} : vector<8x96xbf16> to vector<8x8xbf16>
    %206 = vector.extract_strided_slice %185 {offsets = [0, 72], sizes = [8, 8], strides = [1, 1]} : vector<8x96xbf16> to vector<8x8xbf16>
    "tpu.trace_start"() <{level = 10 : i32, message = "qd,kd->qk"}> : () -> ()
    %cst_66 = arith.constant dense<0.000000e+00> : vector<8x8xf32>
    %207 = tpu.matmul %204, %205, %cst_66 {dimension_numbers = #tpu.dot_dimension_numbers<[1], [1], [0], [0], [0, 0, 1, 0], [], []>} : vector<8x8xbf16>, vector<8x8xbf16>, vector<8x8xf32> -> vector<8x8xf32>
    "tpu.trace_stop"() : () -> ()
    %208 = vector.broadcast %3 : vector<1x8xf32> to vector<8x8xf32>
    %209 = arith.addf %207, %208 : vector<8x8xf32>
    %cst_67 = arith.constant dense<0xFF800000> : vector<8xf32>
    %210 = vector.multi_reduction <maximumf>, %209, %cst_67 [1] : vector<8x8xf32> to vector<8xf32>
    %211 = vector.shape_cast %210 : vector<8xf32> to vector<8x1xf32>
    %212 = vector.broadcast %211 : vector<8x1xf32> to vector<8x8xf32>
    %213 = arith.subf %209, %212 : vector<8x8xf32>
    %214 = math.exp %213 : vector<8x8xf32>
    %cst_68 = arith.constant dense<0.000000e+00> : vector<8xf32>
    %215 = vector.multi_reduction <add>, %214, %cst_68 [1] : vector<8x8xf32> to vector<8xf32>
    %216 = vector.shape_cast %215 : vector<8xf32> to vector<8x1xf32>
    %217 = tpu.reciprocal %216 {approx = true} : vector<8x1xf32> -> vector<8x1xf32>
    %218 = vector.broadcast %217 : vector<8x1xf32> to vector<8x8xf32>
    %219 = arith.mulf %214, %218 : vector<8x8xf32>
    %220 = arith.truncf %219 : vector<8x8xf32> to vector<8x8xbf16>
    %cst_69 = arith.constant dense<0.000000e+00> : vector<8x8xf32>
    %221 = tpu.matmul %220, %206, %cst_69 {dimension_numbers = #tpu.dot_dimension_numbers<[1], [0], [0], [1], [0, 0, 1, 1], [], []>} : vector<8x8xbf16>, vector<8x8xbf16>, vector<8x8xf32> -> vector<8x8xf32>
    %222 = vector.extract_strided_slice %185 {offsets = [0, 16], sizes = [8, 8], strides = [1, 1]} : vector<8x96xbf16> to vector<8x8xbf16>
    %223 = vector.extract_strided_slice %185 {offsets = [0, 48], sizes = [8, 8], strides = [1, 1]} : vector<8x96xbf16> to vector<8x8xbf16>
    %224 = vector.extract_strided_slice %185 {offsets = [0, 80], sizes = [8, 8], strides = [1, 1]} : vector<8x96xbf16> to vector<8x8xbf16>
    "tpu.trace_start"() <{level = 10 : i32, message = "qd,kd->qk"}> : () -> ()
    %cst_70 = arith.constant dense<0.000000e+00> : vector<8x8xf32>
    %225 = tpu.matmul %222, %223, %cst_70 {dimension_numbers = #tpu.dot_dimension_numbers<[1], [1], [0], [0], [0, 0, 1, 0], [], []>} : vector<8x8xbf16>, vector<8x8xbf16>, vector<8x8xf32> -> vector<8x8xf32>
    "tpu.trace_stop"() : () -> ()
    %226 = vector.broadcast %3 : vector<1x8xf32> to vector<8x8xf32>
    %227 = arith.addf %225, %226 : vector<8x8xf32>
    %cst_71 = arith.constant dense<0xFF800000> : vector<8xf32>
    %228 = vector.multi_reduction <maximumf>, %227, %cst_71 [1] : vector<8x8xf32> to vector<8xf32>
    %229 = vector.shape_cast %228 : vector<8xf32> to vector<8x1xf32>
    %230 = vector.broadcast %229 : vector<8x1xf32> to vector<8x8xf32>
    %231 = arith.subf %227, %230 : vector<8x8xf32>
    %232 = math.exp %231 : vector<8x8xf32>
    %cst_72 = arith.constant dense<0.000000e+00> : vector<8xf32>
    %233 = vector.multi_reduction <add>, %232, %cst_72 [1] : vector<8x8xf32> to vector<8xf32>
    %234 = vector.shape_cast %233 : vector<8xf32> to vector<8x1xf32>
    %235 = tpu.reciprocal %234 {approx = true} : vector<8x1xf32> -> vector<8x1xf32>
    %236 = vector.broadcast %235 : vector<8x1xf32> to vector<8x8xf32>
    %237 = arith.mulf %232, %236 : vector<8x8xf32>
    %238 = arith.truncf %237 : vector<8x8xf32> to vector<8x8xbf16>
    %cst_73 = arith.constant dense<0.000000e+00> : vector<8x8xf32>
    %239 = tpu.matmul %238, %224, %cst_73 {dimension_numbers = #tpu.dot_dimension_numbers<[1], [0], [0], [1], [0, 0, 1, 1], [], []>} : vector<8x8xbf16>, vector<8x8xbf16>, vector<8x8xf32> -> vector<8x8xf32>
    %240 = vector.extract_strided_slice %185 {offsets = [0, 24], sizes = [8, 8], strides = [1, 1]} : vector<8x96xbf16> to vector<8x8xbf16>
    %241 = vector.extract_strided_slice %185 {offsets = [0, 56], sizes = [8, 8], strides = [1, 1]} : vector<8x96xbf16> to vector<8x8xbf16>
    %242 = vector.extract_strided_slice %185 {offsets = [0, 88], sizes = [8, 8], strides = [1, 1]} : vector<8x96xbf16> to vector<8x8xbf16>
    "tpu.trace_start"() <{level = 10 : i32, message = "qd,kd->qk"}> : () -> ()
    %cst_74 = arith.constant dense<0.000000e+00> : vector<8x8xf32>
    %243 = tpu.matmul %240, %241, %cst_74 {dimension_numbers = #tpu.dot_dimension_numbers<[1], [1], [0], [0], [0, 0, 1, 0], [], []>} : vector<8x8xbf16>, vector<8x8xbf16>, vector<8x8xf32> -> vector<8x8xf32>
    "tpu.trace_stop"() : () -> ()
    %244 = vector.broadcast %3 : vector<1x8xf32> to vector<8x8xf32>
    %245 = arith.addf %243, %244 : vector<8x8xf32>
    %cst_75 = arith.constant dense<0xFF800000> : vector<8xf32>
    %246 = vector.multi_reduction <maximumf>, %245, %cst_75 [1] : vector<8x8xf32> to vector<8xf32>
    %247 = vector.shape_cast %246 : vector<8xf32> to vector<8x1xf32>
    %248 = vector.broadcast %247 : vector<8x1xf32> to vector<8x8xf32>
    %249 = arith.subf %245, %248 : vector<8x8xf32>
    %250 = math.exp %249 : vector<8x8xf32>
    %cst_76 = arith.constant dense<0.000000e+00> : vector<8xf32>
    %251 = vector.multi_reduction <add>, %250, %cst_76 [1] : vector<8x8xf32> to vector<8xf32>
    %252 = vector.shape_cast %251 : vector<8xf32> to vector<8x1xf32>
    %253 = tpu.reciprocal %252 {approx = true} : vector<8x1xf32> -> vector<8x1xf32>
    %254 = vector.broadcast %253 : vector<8x1xf32> to vector<8x8xf32>
    %255 = arith.mulf %250, %254 : vector<8x8xf32>
    %256 = arith.truncf %255 : vector<8x8xf32> to vector<8x8xbf16>
    %cst_77 = arith.constant dense<0.000000e+00> : vector<8x8xf32>
    %257 = tpu.matmul %256, %242, %cst_77 {dimension_numbers = #tpu.dot_dimension_numbers<[1], [0], [0], [1], [0, 0, 1, 1], [], []>} : vector<8x8xbf16>, vector<8x8xbf16>, vector<8x8xf32> -> vector<8x8xf32>
    %258 = tpu.concatenate %203, %221, %239, %257 in 1 : vector<8x8xf32>, vector<8x8xf32>, vector<8x8xf32>, vector<8x8xf32> -> vector<8x32xf32>
    %259 = arith.truncf %258 : vector<8x32xf32> to vector<8x32xbf16>
    %c0_78 = arith.constant 0 : index
    %c0_79 = arith.constant 0 : index
    %260 = vector.load %arg4[%c0_78, %c0_79] : memref<32x32xbf16, #tpu.memory_space<vmem>>, vector<32x32xbf16>
    %cst_80 = arith.constant dense<0.000000e+00> : vector<8x32xf32>
    %261 = tpu.matmul %259, %260, %cst_80 {dimension_numbers = #tpu.dot_dimension_numbers<[1], [0], [0], [1], [0, 0, 1, 1], [], []>} : vector<8x32xbf16>, vector<32x32xbf16>, vector<8x32xf32> -> vector<8x32xf32>
    %c0_81 = arith.constant 0 : index
    %c0_82 = arith.constant 0 : index
    %262 = vector.load %arg8[%c0_81, %c0_82] : memref<7x32xf32, #tpu.memory_space<vmem>>, vector<1x32xf32>
    %263 = vector.shape_cast %262 : vector<1x32xf32> to vector<32xf32>
    %264 = vector.shape_cast %263 : vector<32xf32> to vector<1x32xf32>
    %265 = vector.broadcast %264 : vector<1x32xf32> to vector<8x32xf32>
    %266 = arith.addf %261, %265 : vector<8x32xf32>
    %267 = arith.addf %178, %266 : vector<8x32xf32>
    %c2_83 = arith.constant 2 : index
    %c0_84 = arith.constant 0 : index
    %268 = vector.load %arg8[%c2_83, %c0_84] : memref<7x32xf32, #tpu.memory_space<vmem>>, vector<1x32xf32>
    %269 = vector.shape_cast %268 : vector<1x32xf32> to vector<32xf32>
    %c3_85 = arith.constant 3 : index
    %c0_86 = arith.constant 0 : index
    %270 = vector.load %arg8[%c3_85, %c0_86] : memref<7x32xf32, #tpu.memory_space<vmem>>, vector<1x32xf32>
    %271 = vector.shape_cast %270 : vector<1x32xf32> to vector<32xf32>
    %cst_87 = arith.constant dense<0.000000e+00> : vector<8xf32>
    %272 = vector.multi_reduction <add>, %267, %cst_87 [1] : vector<8x32xf32> to vector<8xf32>
    %273 = vector.shape_cast %272 : vector<8xf32> to vector<8x1xf32>
    %cst_88 = arith.constant 3.200000e+01 : f32
    %274 = vector.broadcast %cst_88 : f32 to vector<8x1xf32>
    %275 = arith.divf %273, %274 : vector<8x1xf32>
    %276 = vector.broadcast %275 : vector<8x1xf32> to vector<8x32xf32>
    %277 = arith.subf %267, %276 : vector<8x32xf32>
    %278 = arith.mulf %277, %277 : vector<8x32xf32>
    %cst_89 = arith.constant dense<0.000000e+00> : vector<8xf32>
    %279 = vector.multi_reduction <add>, %278, %cst_89 [1] : vector<8x32xf32> to vector<8xf32>
    %280 = vector.shape_cast %279 : vector<8xf32> to vector<8x1xf32>
    %cst_90 = arith.constant 3.200000e+01 : f32
    %281 = vector.broadcast %cst_90 : f32 to vector<8x1xf32>
    %282 = arith.divf %280, %281 : vector<8x1xf32>
    %283 = vector.broadcast %275 : vector<8x1xf32> to vector<8x32xf32>
    %284 = arith.subf %267, %283 : vector<8x32xf32>
    %cst_91 = arith.constant 9.99999996E-13 : f32
    %285 = vector.broadcast %cst_91 : f32 to vector<8x1xf32>
    %286 = arith.addf %282, %285 : vector<8x1xf32>
    %287 = math.rsqrt %286 : vector<8x1xf32>
    %288 = vector.broadcast %287 : vector<8x1xf32> to vector<8x32xf32>
    %289 = arith.mulf %284, %288 : vector<8x32xf32>
    %290 = vector.shape_cast %269 : vector<32xf32> to vector<1x32xf32>
    %291 = vector.broadcast %290 : vector<1x32xf32> to vector<8x32xf32>
    %292 = arith.mulf %289, %291 : vector<8x32xf32>
    %293 = vector.shape_cast %271 : vector<32xf32> to vector<1x32xf32>
    %294 = vector.broadcast %293 : vector<1x32xf32> to vector<8x32xf32>
    %295 = arith.addf %292, %294 : vector<8x32xf32>
    %296 = arith.truncf %295 : vector<8x32xf32> to vector<8x32xbf16>
    %c0_92 = arith.constant 0 : index
    %c0_93 = arith.constant 0 : index
    %297 = vector.load %arg5[%c0_92, %c0_93] : memref<32x64xbf16, #tpu.memory_space<vmem>>, vector<32x64xbf16>
    %cst_94 = arith.constant dense<0.000000e+00> : vector<8x64xf32>
    %298 = tpu.matmul %296, %297, %cst_94 {dimension_numbers = #tpu.dot_dimension_numbers<[1], [0], [0], [1], [0, 0, 1, 1], [], []>} : vector<8x32xbf16>, vector<32x64xbf16>, vector<8x64xf32> -> vector<8x64xf32>
    %c0_95 = arith.constant 0 : index
    %c0_96 = arith.constant 0 : index
    %299 = vector.load %arg9[%c0_95, %c0_96] : memref<1x64xf32, #tpu.memory_space<vmem>>, vector<1x64xf32>
    %300 = vector.shape_cast %299 : vector<1x64xf32> to vector<64xf32>
    %301 = vector.shape_cast %300 : vector<64xf32> to vector<1x64xf32>
    %302 = vector.broadcast %301 : vector<1x64xf32> to vector<8x64xf32>
    %303 = arith.addf %298, %302 : vector<8x64xf32>
    %304 = arith.mulf %303, %303 : vector<8x64xf32>
    %305 = arith.mulf %303, %304 : vector<8x64xf32>
    %cst_97 = arith.constant 4.471500e-02 : f32
    %306 = vector.broadcast %cst_97 : f32 to vector<8x64xf32>
    %307 = arith.mulf %306, %305 : vector<8x64xf32>
    %308 = arith.addf %303, %307 : vector<8x64xf32>
    %cst_98 = arith.constant 0.797884583 : f32
    %309 = vector.broadcast %cst_98 : f32 to vector<8x64xf32>
    %310 = arith.mulf %309, %308 : vector<8x64xf32>
    %311 = math.tanh %310 : vector<8x64xf32>
    %cst_99 = arith.constant 1.000000e+00 : f32
    %312 = vector.broadcast %cst_99 : f32 to vector<8x64xf32>
    %313 = arith.addf %312, %311 : vector<8x64xf32>
    %cst_100 = arith.constant 5.000000e-01 : f32
    %314 = vector.broadcast %cst_100 : f32 to vector<8x64xf32>
    %315 = arith.mulf %314, %313 : vector<8x64xf32>
    %316 = arith.mulf %303, %315 : vector<8x64xf32>
    %317 = arith.truncf %316 : vector<8x64xf32> to vector<8x64xbf16>
    %c0_101 = arith.constant 0 : index
    %c0_102 = arith.constant 0 : index
    %318 = vector.load %arg6[%c0_101, %c0_102] : memref<64x32xbf16, #tpu.memory_space<vmem>>, vector<64x32xbf16>
    %cst_103 = arith.constant dense<0.000000e+00> : vector<8x32xf32>
    %319 = tpu.matmul %317, %318, %cst_103 {dimension_numbers = #tpu.dot_dimension_numbers<[1], [0], [0], [1], [0, 0, 1, 1], [], []>} : vector<8x64xbf16>, vector<64x32xbf16>, vector<8x32xf32> -> vector<8x32xf32>
    %c1_104 = arith.constant 1 : index
    %c0_105 = arith.constant 0 : index
    %320 = vector.load %arg8[%c1_104, %c0_105] : memref<7x32xf32, #tpu.memory_space<vmem>>, vector<1x32xf32>
    %321 = vector.shape_cast %320 : vector<1x32xf32> to vector<32xf32>
    %322 = vector.shape_cast %321 : vector<32xf32> to vector<1x32xf32>
    %323 = vector.broadcast %322 : vector<1x32xf32> to vector<8x32xf32>
    %324 = arith.addf %319, %323 : vector<8x32xf32>
    %325 = arith.addf %295, %324 : vector<8x32xf32>
    %c4_106 = arith.constant 4 : index
    %c0_107 = arith.constant 0 : index
    %326 = vector.load %arg8[%c4_106, %c0_107] : memref<7x32xf32, #tpu.memory_space<vmem>>, vector<1x32xf32>
    %327 = vector.shape_cast %326 : vector<1x32xf32> to vector<32xf32>
    %c5_108 = arith.constant 5 : index
    %c0_109 = arith.constant 0 : index
    %328 = vector.load %arg8[%c5_108, %c0_109] : memref<7x32xf32, #tpu.memory_space<vmem>>, vector<1x32xf32>
    %329 = vector.shape_cast %328 : vector<1x32xf32> to vector<32xf32>
    %cst_110 = arith.constant dense<0.000000e+00> : vector<8xf32>
    %330 = vector.multi_reduction <add>, %325, %cst_110 [1] : vector<8x32xf32> to vector<8xf32>
    %331 = vector.shape_cast %330 : vector<8xf32> to vector<8x1xf32>
    %cst_111 = arith.constant 3.200000e+01 : f32
    %332 = vector.broadcast %cst_111 : f32 to vector<8x1xf32>
    %333 = arith.divf %331, %332 : vector<8x1xf32>
    %334 = vector.broadcast %333 : vector<8x1xf32> to vector<8x32xf32>
    %335 = arith.subf %325, %334 : vector<8x32xf32>
    %336 = arith.mulf %335, %335 : vector<8x32xf32>
    %cst_112 = arith.constant dense<0.000000e+00> : vector<8xf32>
    %337 = vector.multi_reduction <add>, %336, %cst_112 [1] : vector<8x32xf32> to vector<8xf32>
    %338 = vector.shape_cast %337 : vector<8xf32> to vector<8x1xf32>
    %cst_113 = arith.constant 3.200000e+01 : f32
    %339 = vector.broadcast %cst_113 : f32 to vector<8x1xf32>
    %340 = arith.divf %338, %339 : vector<8x1xf32>
    %341 = vector.broadcast %333 : vector<8x1xf32> to vector<8x32xf32>
    %342 = arith.subf %325, %341 : vector<8x32xf32>
    %cst_114 = arith.constant 9.99999996E-13 : f32
    %343 = vector.broadcast %cst_114 : f32 to vector<8x1xf32>
    %344 = arith.addf %340, %343 : vector<8x1xf32>
    %345 = math.rsqrt %344 : vector<8x1xf32>
    %346 = vector.broadcast %345 : vector<8x1xf32> to vector<8x32xf32>
    %347 = arith.mulf %342, %346 : vector<8x32xf32>
    %348 = vector.shape_cast %327 : vector<32xf32> to vector<1x32xf32>
    %349 = vector.broadcast %348 : vector<1x32xf32> to vector<8x32xf32>
    %350 = arith.mulf %347, %349 : vector<8x32xf32>
    %351 = vector.shape_cast %329 : vector<32xf32> to vector<1x32xf32>
    %352 = vector.broadcast %351 : vector<1x32xf32> to vector<8x32xf32>
    %353 = arith.addf %350, %352 : vector<8x32xf32>
    %354 = vector.extract_strided_slice %353 {offsets = [0, 0], sizes = [1, 32], strides = [1, 1]} : vector<8x32xf32> to vector<1x32xf32>
    %355 = arith.truncf %354 : vector<1x32xf32> to vector<1x32xbf16>
    %c0_115 = arith.constant 0 : index
    %c0_116 = arith.constant 0 : index
    %356 = vector.load %arg10[%c0_115, %c0_116] : memref<32x32xbf16, #tpu.memory_space<vmem>>, vector<32x32xbf16>
    %cst_117 = arith.constant dense<0.000000e+00> : vector<1x32xf32>
    %357 = tpu.matmul %355, %356, %cst_117 {dimension_numbers = #tpu.dot_dimension_numbers<[1], [0], [0], [1], [0, 0, 1, 1], [], []>} : vector<1x32xbf16>, vector<32x32xbf16>, vector<1x32xf32> -> vector<1x32xf32>
    %c6 = arith.constant 6 : index
    %c0_118 = arith.constant 0 : index
    %358 = vector.load %arg8[%c6, %c0_118] : memref<7x32xf32, #tpu.memory_space<vmem>>, vector<1x32xf32>
    %359 = vector.shape_cast %358 : vector<1x32xf32> to vector<32xf32>
    %360 = vector.shape_cast %359 : vector<32xf32> to vector<1x32xf32>
    %361 = arith.addf %357, %360 : vector<1x32xf32>
    %362 = math.tanh %361 : vector<1x32xf32>
    %c0_119 = arith.constant 0 : index
    %c0_120 = arith.constant 0 : index
    %363 = vector.load %arg11[%c0_119, %c0_120] : memref<1x32xf32, #tpu.memory_space<vmem>>, vector<1x32xf32>
    %364 = arith.mulf %362, %363 : vector<1x32xf32>
    %cst_121 = arith.constant dense<0.000000e+00> : vector<1xf32>
    %365 = vector.multi_reduction <add>, %364, %cst_121 [1] : vector<1x32xf32> to vector<1xf32>
    %366 = vector.shape_cast %365 : vector<1xf32> to vector<1x1xf32>
    %c0_122 = arith.constant 0 : index
    %c0_123 = arith.constant 0 : index
    %367 = vector.load %arg12[%c0_122, %c0_123] : memref<1x1xf32, #tpu.memory_space<vmem>>, vector<1x1xf32>
    %368 = arith.addf %366, %367 : vector<1x1xf32>
    %c0_124 = arith.constant 0 : index
    %c0_125 = arith.constant 0 : index
    %c0_126 = arith.constant 0 : index
    %369 = vector.load %arg13[%c0_124, %c0_125, %c0_126] : memref<1x1x1xf32, #tpu.memory_space<vmem>>, vector<1x1x1xf32>
    %370 = vector.shape_cast %369 : vector<1x1x1xf32> to vector<1x1xf32>
    %371 = vector.shape_cast %368 : vector<1x1xf32> to vector<1x1x1xf32>
    tpu.vector_store %arg13[%c0_124, %c0_125, %c0_126], %371 {strides = array<i32>} : memref<1x1x1xf32, #tpu.memory_space<vmem>>, vector<1x1x1xf32>,
    return
  }
  func.func @transform_0(%arg0: i32) -> (i32, i32, i32) {
    %c0_i32 = arith.constant 0 : i32
    %c0_i32_0 = arith.constant 0 : i32
    %c0_i32_1 = arith.constant 0 : i32
    return %arg0, %c0_i32, %c0_i32_0 : i32, i32, i32
  }
  func.func @transform_1(%arg0: i32) -> (i32, i32, i32) {
    %c0_i32 = arith.constant 0 : i32
    %c0_i32_0 = arith.constant 0 : i32
    %c0_i32_1 = arith.constant 0 : i32
    return %arg0, %c0_i32, %c0_i32_0 : i32, i32, i32
  }
  func.func @transform_2(%arg0: i32) -> (i32, i32) {
    %c0_i32 = arith.constant 0 : i32
    %c0_i32_0 = arith.constant 0 : i32
    %c0_i32_1 = arith.constant 0 : i32
    return %c0_i32, %c0_i32_0 : i32, i32
  }
  func.func @transform_3(%arg0: i32) -> (i32, i32) {
    %c0_i32 = arith.constant 0 : i32
    %c0_i32_0 = arith.constant 0 : i32
    %c0_i32_1 = arith.constant 0 : i32
    return %c0_i32, %c0_i32_0 : i32, i32
  }
  func.func @transform_4(%arg0: i32) -> (i32, i32) {
    %c0_i32 = arith.constant 0 : i32
    %c0_i32_0 = arith.constant 0 : i32
    %c0_i32_1 = arith.constant 0 : i32
    return %c0_i32, %c0_i32_0 : i32, i32
  }
  func.func @transform_5(%arg0: i32) -> (i32, i32) {
    %c0_i32 = arith.constant 0 : i32
    %c0_i32_0 = arith.constant 0 : i32
    %c0_i32_1 = arith.constant 0 : i32
    return %c0_i32, %c0_i32_0 : i32, i32
  }
  func.func @transform_6(%arg0: i32) -> (i32, i32) {
    %c0_i32 = arith.constant 0 : i32
    %c0_i32_0 = arith.constant 0 : i32
    %c0_i32_1 = arith.constant 0 : i32
    return %c0_i32, %c0_i32_0 : i32, i32
  }
  func.func @transform_7(%arg0: i32) -> (i32, i32) {
    %c0_i32 = arith.constant 0 : i32
    %c0_i32_0 = arith.constant 0 : i32
    %c0_i32_1 = arith.constant 0 : i32
    return %c0_i32, %c0_i32_0 : i32, i32
  }
  func.func @transform_8(%arg0: i32) -> (i32, i32) {
    %c0_i32 = arith.constant 0 : i32
    %c0_i32_0 = arith.constant 0 : i32
    %c0_i32_1 = arith.constant 0 : i32
    return %c0_i32, %c0_i32_0 : i32, i32
  }
  func.func @transform_9(%arg0: i32) -> (i32, i32) {
    %c0_i32 = arith.constant 0 : i32
    %c0_i32_0 = arith.constant 0 : i32
    %c0_i32_1 = arith.constant 0 : i32
    return %c0_i32, %c0_i32_0 : i32, i32
  }
  func.func @transform_10(%arg0: i32) -> (i32, i32) {
    %c0_i32 = arith.constant 0 : i32
    %c0_i32_0 = arith.constant 0 : i32
    %c0_i32_1 = arith.constant 0 : i32
    return %c0_i32, %c0_i32_0 : i32, i32
  }
  func.func @transform_11(%arg0: i32) -> (i32, i32) {
    %c0_i32 = arith.constant 0 : i32
    %c0_i32_0 = arith.constant 0 : i32
    %c0_i32_1 = arith.constant 0 : i32
    return %c0_i32, %c0_i32_0 : i32, i32
  }
  func.func @transform_12(%arg0: i32) -> (i32, i32, i32) {
    %c0_i32 = arith.constant 0 : i32
    %c0_i32_0 = arith.constant 0 : i32
    %c0_i32_1 = arith.constant 0 : i32
    return %arg0, %c0_i32, %c0_i32_0 : i32, i32, i32
  }
}

</mosaic_0001>

<llo_original>
// kernel: sentence_pair_classifier_forward.1
$region0: #{sentence_pair_classifier_forward.1}
  #allocation0 [shape = 'u32[]', space=smem, size = 0x4, offset = 0x4, fixed_abs, tag = 'smem constant byte address 0x4 - core index']
  #allocation1 [shape = 'u32[144,128]{1,0:T(1,128)}', space=vmem, size = 0x12000, scoped, tag = 'internal scratch']
  #allocation2 [shape = 'f32[1,1]{1,0:T(1,128)S(1)}', space=vmem, size = 0x200, scoped, tag = 'scoped memory for sentence_pair_classifier_forward.1']
  %s0 = inlined_call_operand.vmem [shape: f32[2,8,32], index: 0, kind: input, shape index: {}]
  %s1 = inlined_call_operand.vmem [shape: f32[2,1,8], index: 1, kind: input, shape index: {}]
  %s2 = inlined_call_operand.vmem [shape: bf16[32,96], index: 2, kind: input, shape index: {}]
  %s3 = inlined_call_operand.vmem [shape: bf16[32,32], index: 3, kind: input, shape index: {}]
  %s4 = inlined_call_operand.vmem [shape: bf16[32,64], index: 4, kind: input, shape index: {}]
  %s5 = inlined_call_operand.vmem [shape: bf16[64,32], index: 5, kind: input, shape index: {}]
  %s6 = inlined_call_operand.vmem [shape: f32[1,96], index: 6, kind: input, shape index: {}]
  %s7 = inlined_call_operand.vmem [shape: f32[7,32], index: 7, kind: input, shape index: {}]
  %s8 = inlined_call_operand.vmem [shape: f32[1,64], index: 8, kind: input, shape index: {}]
  %s9 = inlined_call_operand.vmem [shape: bf16[32,32], index: 9, kind: input, shape index: {}]
  %s10 = inlined_call_operand.vmem [shape: f32[1,32], index: 10, kind: input, shape index: {}]
  %s11 = inlined_call_operand.<no memory space> [shape: f32[1,1], index: 11, kind: input, shape index: {}]
  %s12 = inlined_call_operand.vmem [shape: f32[2,1,1], index: 12, kind: output, shape index: {}]
  %s13 = sld [smem:[#allocation0]]
  $region81: #{sentence_pair_classifier_forward.1} parent=0
    _
  %s15 = ssub.s32 1, %s13
  %s16 = scalar_select 0, %s15, %s13
  %v17 = vstv %s11
  %18 = vst [vmem:[#allocation2] sm:$0x1] %v17
  loop: start=0, step=1, limit=4
  $region2: #{sentence_pair_classifier_forward.1} parent=0 // loop_pre_header
    _
  $region3: #{sentence_pair_classifier_forward.1} parent=0 // loop_header
    %s20 = sphi 0, %s24
    %p21 = scmp.ge.s32.totalorder %s20, 4
    %s30 = sphi 0, %s32
    %s33 = sphi 0, %s30
    %s34 = sphi 0, %s33
    %s50 = sphi 0, %s34
    %s56 = sphi 0, %s58
    %s59 = sphi 0, %s56
    %s60 = sphi 0, %s59
    %s76 = sphi 0, %s60
    %s80 = sphi 0, %s80
    %s82 = sphi 0, %s80
    %s83 = sphi 0, %s82
    %s97 = sphi 0, %s83
    %s101 = sphi 0, %s101
    %s103 = sphi 0, %s101
    %s104 = sphi 0, %s103
    %s118 = sphi 0, %s104
    %s122 = sphi 0, %s122
    %s124 = sphi 0, %s122
    %s125 = sphi 0, %s124
    %s139 = sphi 0, %s125
    %s143 = sphi 0, %s143
    %s145 = sphi 0, %s143
    %s146 = sphi 0, %s145
    %s160 = sphi 0, %s146
    %s164 = sphi 0, %s164
    %s166 = sphi 0, %s164
    %s167 = sphi 0, %s166
    %s181 = sphi 0, %s167
    %s185 = sphi 0, %s185
    %s187 = sphi 0, %s185
    %s188 = sphi 0, %s187
    %s202 = sphi 0, %s188
    %s206 = sphi 0, %s206
    %s208 = sphi 0, %s206
    %s209 = sphi 0, %s208
    %s223 = sphi 0, %s209
    %s227 = sphi 0, %s227
    %s229 = sphi 0, %s227
    %s230 = sphi 0, %s229
    %s244 = sphi 0, %s230
    %s248 = sphi 0, %s248
    %s250 = sphi 0, %s248
    %s251 = sphi 0, %s250
    %s265 = sphi 0, %s251
    %s269 = sphi 0, %s269
    %s271 = sphi 0, %s269
    %s272 = sphi 0, %s271
    %s286 = sphi 0, %s272
    %s292 = sphi 0, %s294
    %s295 = sphi 0, %s292
    %s296 = sphi 0, %s295
    %s312 = sphi 0, %s296
  $region4: #{sentence_pair_classifier_forward.1} parent=0 // loop_header_branch
    %23 = sbr.rel (%p21) target = $region8
  $region5: #{sentence_pair_classifier_forward.1} parent=0 // loop_body
    %s25 = ssub.s32 %s20, 1
    %s26 = ssub.s32 %s20, 2
    %s27 = sadd.s32 %s20, 1
    %s28 = ssub.s32 %s20, %s27
    %p29 = scmp.eq.s32.totalorder %s28, 0
    %s31 = sadd.s32 %s30, 1
    %s32 = scalar_select %p29, %s30, %s31
    %p35 = pneg %p29
    %p36 = scmp.eq.s32.totalorder %s20, 1
    %p37 = por %p35, %p36
    %p38 = scmp.ne.s32.totalorder %s30, %s33
    %p39 = scmp.eq.s32.totalorder %s20, 0
    %p40 = por %p38, %p39
    %p41 = scmp.ne.s32.totalorder %s30, %s33
    %p42 = scmp.eq.s32.totalorder %s25, 1
    %p43 = por %p41, %p42
    %p44 = scmp.ne.s32.totalorder %s33, %s34
    %p45 = scmp.eq.s32.totalorder %s25, 0
    %p46 = por %p44, %p45
    %p47 = scmp.ne.s32.totalorder %s33, %s34
    %p48 = scmp.eq.s32.totalorder %s26, 1
    %p49 = por %p47, %p48
    %p51 = scmp.ne.s32.totalorder %s34, %s50
    %p52 = scmp.eq.s32.totalorder %s26, 0
    %p53 = por %p51, %p52
    %s54 = ssub.s32 %s20, %s27
    %p55 = scmp.eq.s32.totalorder %s54, 0
    %s57 = sadd.s32 %s56, 1
    %s58 = scalar_select %p55, %s56, %s57
    %p61 = pneg %p55
    %p62 = scmp.eq.s32.totalorder %s20, 1
    %p63 = por %p61, %p62
    %p64 = scmp.ne.s32.totalorder %s56, %s59
    %p65 = scmp.eq.s32.totalorder %s20, 0
    %p66 = por %p64, %p65
    %p67 = scmp.ne.s32.totalorder %s56, %s59
    %p68 = scmp.eq.s32.totalorder %s25, 1
    %p69 = por %p67, %p68
    %p70 = scmp.ne.s32.totalorder %s59, %s60
    %p71 = scmp.eq.s32.totalorder %s25, 0
    %p72 = por %p70, %p71
    %p73 = scmp.ne.s32.totalorder %s59, %s60
    %p74 = scmp.eq.s32.totalorder %s26, 1
    %p75 = por %p73, %p74
    %p77 = scmp.ne.s32.totalorder %s60, %s76
    %p78 = scmp.eq.s32.totalorder %s26, 0
    %p79 = por %p77, %p78
    %s81 = sadd.s32 %s80, 1
    %p84 = scmp.eq.s32.totalorder %s20, 1
    %p85 = scmp.ne.s32.totalorder %s80, %s82
    %p86 = scmp.eq.s32.totalorder %s20, 0
    %p87 = por %p85, %p86
    %p88 = scmp.ne.s32.totalorder %s80, %s82
    %p89 = scmp.eq.s32.totalorder %s25, 1
    %p90 = por %p88, %p89
    %p91 = scmp.ne.s32.totalorder %s82, %s83
    %p92 = scmp.eq.s32.totalorder %s25, 0
    %p93 = por %p91, %p92
    %p94 = scmp.ne.s32.totalorder %s82, %s83
    %p95 = scmp.eq.s32.totalorder %s26, 1
    %p96 = por %p94, %p95
    %p98 = scmp.ne.s32.totalorder %s83, %s97
    %p99 = scmp.eq.s32.totalorder %s26, 0
    %p100 = por %p98, %p99
    %s102 = sadd.s32 %s101, 1
    %p105 = scmp.eq.s32.totalorder %s20, 1
    %p106 = scmp.ne.s32.totalorder %s101, %s103
    %p107 = scmp.eq.s32.totalorder %s20, 0
    %p108 = por %p106, %p107
    %p109 = scmp.ne.s32.totalorder %s101, %s103
    %p110 = scmp.eq.s32.totalorder %s25, 1
    %p111 = por %p109, %p110
    %p112 = scmp.ne.s32.totalorder %s103, %s104
    %p113 = scmp.eq.s32.totalorder %s25, 0
    %p114 = por %p112, %p113
    %p115 = scmp.ne.s32.totalorder %s103, %s104
    %p116 = scmp.eq.s32.totalorder %s26, 1
    %p117 = por %p115, %p116
    %p119 = scmp.ne.s32.totalorder %s104, %s118
    %p120 = scmp.eq.s32.totalorder %s26, 0
    %p121 = por %p119, %p120
    %s123 = sadd.s32 %s122, 1
    %p126 = scmp.eq.s32.totalorder %s20, 1
    %p127 = scmp.ne.s32.totalorder %s122, %s124
    %p128 = scmp.eq.s32.totalorder %s20, 0
    %p129 = por %p127, %p128
    %p130 = scmp.ne.s32.totalorder %s122, %s124
    %p131 = scmp.eq.s32.totalorder %s25, 1
    %p132 = por %p130, %p131
    %p133 = scmp.ne.s32.totalorder %s124, %s125
    %p134 = scmp.eq.s32.totalorder %s25, 0
    %p135 = por %p133, %p134
    %p136 = scmp.ne.s32.totalorder %s124, %s125
    %p137 = scmp.eq.s32.totalorder %s26, 1
    %p138 = por %p136, %p137
    %p140 = scmp.ne.s32.totalorder %s125, %s139
    %p141 = scmp.eq.s32.totalorder %s26, 0
    %p142 = por %p140, %p141
    %s144 = sadd.s32 %s143, 1
    %p147 = scmp.eq.s32.totalorder %s20, 1
    %p148 = scmp.ne.s32.totalorder %s143, %s145
    %p149 = scmp.eq.s32.totalorder %s20, 0
    %p150 = por %p148, %p149
    %p151 = scmp.ne.s32.totalorder %s143, %s145
    %p152 = scmp.eq.s32.totalorder %s25, 1
    %p153 = por %p151, %p152
    %p154 = scmp.ne.s32.totalorder %s145, %s146
    %p155 = scmp.eq.s32.totalorder %s25, 0
    %p156 = por %p154, %p155
    %p157 = scmp.ne.s32.totalorder %s145, %s146
    %p158 = scmp.eq.s32.totalorder %s26, 1
    %p159 = por %p157, %p158
    %p161 = scmp.ne.s32.totalorder %s146, %s160
    %p162 = scmp.eq.s32.totalorder %s26, 0
    %p163 = por %p161, %p162
    %s165 = sadd.s32 %s164, 1
    %p168 = scmp.eq.s32.totalorder %s20, 1
    %p169 = scmp.ne.s32.totalorder %s164, %s166
    %p170 = scmp.eq.s32.totalorder %s20, 0
    %p171 = por %p169, %p170
    %p172 = scmp.ne.s32.totalorder %s164, %s166
    %p173 = scmp.eq.s32.totalorder %s25, 1
    %p174 = por %p172, %p173
    %p175 = scmp.ne.s32.totalorder %s166, %s167
    %p176 = scmp.eq.s32.totalorder %s25, 0
    %p177 = por %p175, %p176
    %p178 = scmp.ne.s32.totalorder %s166, %s167
    %p179 = scmp.eq.s32.totalorder %s26, 1
    %p180 = por %p178, %p179
    %p182 = scmp.ne.s32.totalorder %s167, %s181
    %p183 = scmp.eq.s32.totalorder %s26, 0
    %p184 = por %p182, %p183
    %s186 = sadd.s32 %s185, 1
    %p189 = scmp.eq.s32.totalorder %s20, 1
    %p190 = scmp.ne.s32.totalorder %s185, %s187
    %p191 = scmp.eq.s32.totalorder %s20, 0
    %p192 = por %p190, %p191
    %p193 = scmp.ne.s32.totalorder %s185, %s187
    %p194 = scmp.eq.s32.totalorder %s25, 1
    %p195 = por %p193, %p194
    %p196 = scmp.ne.s32.totalorder %s187, %s188
    %p197 = scmp.eq.s32.totalorder %s25, 0
    %p198 = por %p196, %p197
    %p199 = scmp.ne.s32.totalorder %s187, %s188
    %p200 = scmp.eq.s32.totalorder %s26, 1
    %p201 = por %p199, %p200
    %p203 = scmp.ne.s32.totalorder %s188, %s202
    %p204 = scmp.eq.s32.totalorder %s26, 0
    %p205 = por %p203, %p204
    %s207 = sadd.s32 %s206, 1
    %p210 = scmp.eq.s32.totalorder %s20, 1
    %p211 = scmp.ne.s32.totalorder %s206, %s208
    %p212 = scmp.eq.s32.totalorder %s20, 0
    %p213 = por %p211, %p212
    %p214 = scmp.ne.s32.totalorder %s206, %s208
    %p215 = scmp.eq.s32.totalorder %s25, 1
    %p216 = por %p214, %p215
    %p217 = scmp.ne.s32.totalorder %s208, %s209
    %p218 = scmp.eq.s32.totalorder %s25, 0
    %p219 = por %p217, %p218
    %p220 = scmp.ne.s32.totalorder %s208, %s209
    %p221 = scmp.eq.s32.totalorder %s26, 1
    %p222 = por %p220, %p221
    %p224 = scmp.ne.s32.totalorder %s209, %s223
    %p225 = scmp.eq.s32.totalorder %s26, 0
    %p226 = por %p224, %p225
    %s228 = sadd.s32 %s227, 1
    %p231 = scmp.eq.s32.totalorder %s20, 1
    %p232 = scmp.ne.s32.totalorder %s227, %s229
    %p233 = scmp.eq.s32.totalorder %s20, 0
    %p234 = por %p232, %p233
    %p235 = scmp.ne.s32.totalorder %s227, %s229
    %p236 = scmp.eq.s32.totalorder %s25, 1
    %p237 = por %p235, %p236
    %p238 = scmp.ne.s32.totalorder %s229, %s230
    %p239 = scmp.eq.s32.totalorder %s25, 0
    %p240 = por %p238, %p239
    %p241 = scmp.ne.s32.totalorder %s229, %s230
    %p242 = scmp.eq.s32.totalorder %s26, 1
    %p243 = por %p241, %p242
    %p245 = scmp.ne.s32.totalorder %s230, %s244
    %p246 = scmp.eq.s32.totalorder %s26, 0
    %p247 = por %p245, %p246
    %s249 = sadd.s32 %s248, 1
    %p252 = scmp.eq.s32.totalorder %s20, 1
    %p253 = scmp.ne.s32.totalorder %s248, %s250
    %p254 = scmp.eq.s32.totalorder %s20, 0
    %p255 = por %p253, %p254
    %p256 = scmp.ne.s32.totalorder %s248, %s250
    %p257 = scmp.eq.s32.totalorder %s25, 1
    %p258 = por %p256, %p257
    %p259 = scmp.ne.s32.totalorder %s250, %s251
    %p260 = scmp.eq.s32.totalorder %s25, 0
    %p261 = por %p259, %p260
    %p262 = scmp.ne.s32.totalorder %s250, %s251
    %p263 = scmp.eq.s32.totalorder %s26, 1
    %p264 = por %p262, %p263
    %p266 = scmp.ne.s32.totalorder %s251, %s265
    %p267 = scmp.eq.s32.totalorder %s26, 0
    %p268 = por %p266, %p267
    %s270 = sadd.s32 %s269, 1
    %p273 = scmp.eq.s32.totalorder %s20, 1
    %p274 = scmp.ne.s32.totalorder %s269, %s271
    %p275 = scmp.eq.s32.totalorder %s20, 0
    %p276 = por %p274, %p275
    %p277 = scmp.ne.s32.totalorder %s269, %s271
    %p278 = scmp.eq.s32.totalorder %s25, 1
    %p279 = por %p277, %p278
    %p280 = scmp.ne.s32.totalorder %s271, %s272
    %p281 = scmp.eq.s32.totalorder %s25, 0
    %p282 = por %p280, %p281
    %p283 = scmp.ne.s32.totalorder %s271, %s272
    %p284 = scmp.eq.s32.totalorder %s26, 1
    %p285 = por %p283, %p284
    %p287 = scmp.ne.s32.totalorder %s272, %s286
    %p288 = scmp.eq.s32.totalorder %s26, 0
    %p289 = por %p287, %p288
    %s290 = ssub.s32 %s20, %s27
    %p291 = scmp.eq.s32.totalorder %s290, 0
    %s293 = sadd.s32 %s292, 1
    %s294 = scalar_select %p291, %s292, %s293
    %p297 = pneg %p291
    %p298 = scmp.eq.s32.totalorder %s20, 1
    %p299 = por %p297, %p298
    %p300 = scmp.ne.s32.totalorder %s292, %s295
    %p301 = scmp.eq.s32.totalorder %s20, 0
    %p302 = por %p300, %p301
    %p303 = scmp.ne.s32.totalorder %s292, %s295
    %p304 = scmp.eq.s32.totalorder %s25, 1
    %p305 = por %p303, %p304
    %p306 = scmp.ne.s32.totalorder %s295, %s296
    %p307 = scmp.eq.s32.totalorder %s25, 0
    %p308 = por %p306, %p307
    %p309 = scmp.ne.s32.totalorder %s295, %s296
    %p310 = scmp.eq.s32.totalorder %s26, 1
    %p311 = por %p309, %p310
    %p313 = scmp.ne.s32.totalorder %s296, %s312
    %p314 = scmp.eq.s32.totalorder %s26, 0
    %p315 = por %p313, %p314
    %p316 = scmp.le.s32.totalorder 1, %s20
    %p317 = scmp.lt.s32.totalorder %s20, 3
    %p318 = pnand %p316, %p317
    %p319 = pneg %p318
    // Predicated region
    $region9: #{sentence_pair_classifier_forward.1} parent=5 // pred_check
      _
    $region10: #{sentence_pair_classifier_forward.1} parent=5 // pred_check_branch
      %321 = sbr.rel (%p318) target = $region12
    $region11: #{sentence_pair_classifier_forward.1} parent=5 // pred_region
      %s322 = ssub.s32 %s20, 1
      // Predicated region
      $region13: #{sentence_pair_classifier_forward.1} parent=11 // pred_check
        %p323 = pneg %p93
      $region14: #{sentence_pair_classifier_forward.1} parent=11 // pred_check_branch
        %325 = sbr.rel (%p323) target = $region16
      $region15: #{sentence_pair_classifier_forward.1} parent=11 // pred_region
        _
      $region16: #{sentence_pair_classifier_forward.1} parent=11 // pred_fallthru
        _
      // Predicated region
      $region17: #{sentence_pair_classifier_forward.1} parent=11 // pred_check
        %p326 = pneg %p114
      $region18: #{sentence_pair_classifier_forward.1} parent=11 // pred_check_branch
        %328 = sbr.rel (%p326) target = $region20
      $region19: #{sentence_pair_classifier_forward.1} parent=11 // pred_region
        _
      $region20: #{sentence_pair_classifier_forward.1} parent=11 // pred_fallthru
        _
      // Predicated region
      $region21: #{sentence_pair_classifier_forward.1} parent=11 // pred_check
        %p329 = pneg %p135
      $region22: #{sentence_pair_classifier_forward.1} parent=11 // pred_check_branch
        %331 = sbr.rel (%p329) target = $region24
      $region23: #{sentence_pair_classifier_forward.1} parent=11 // pred_region
        _
      $region24: #{sentence_pair_classifier_forward.1} parent=11 // pred_fallthru
        _
      // Predicated region
      $region25: #{sentence_pair_classifier_forward.1} parent=11 // pred_check
        %p332 = pneg %p156
      $region26: #{sentence_pair_classifier_forward.1} parent=11 // pred_check_branch
        %334 = sbr.rel (%p332) target = $region28
      $region27: #{sentence_pair_classifier_forward.1} parent=11 // pred_region
        _
      $region28: #{sentence_pair_classifier_forward.1} parent=11 // pred_fallthru
        _
      // Predicated region
      $region29: #{sentence_pair_classifier_forward.1} parent=11 // pred_check
        %p335 = pneg %p177
      $region30: #{sentence_pair_classifier_forward.1} parent=11 // pred_check_branch
        %337 = sbr.rel (%p335) target = $region32
      $region31: #{sentence_pair_classifier_forward.1} parent=11 // pred_region
        _
      $region32: #{sentence_pair_classifier_forward.1} parent=11 // pred_fallthru
        _
      // Predicated region
      $region33: #{sentence_pair_classifier_forward.1} parent=11 // pred_check
        %p338 = pneg %p198
      $region34: #{sentence_pair_classifier_forward.1} parent=11 // pred_check_branch
        %340 = sbr.rel (%p338) target = $region36
      $region35: #{sentence_pair_classifier_forward.1} parent=11 // pred_region
        _
      $region36: #{sentence_pair_classifier_forward.1} parent=11 // pred_fallthru
        _
      // Predicated region
      $region37: #{sentence_pair_classifier_forward.1} parent=11 // pred_check
        %p341 = pneg %p219
      $region38: #{sentence_pair_classifier_forward.1} parent=11 // pred_check_branch
        %343 = sbr.rel (%p341) target = $region40
      $region39: #{sentence_pair_classifier_forward.1} parent=11 // pred_region
        _
      $region40: #{sentence_pair_classifier_forward.1} parent=11 // pred_fallthru
        _
      // Predicated region
      $region41: #{sentence_pair_classifier_forward.1} parent=11 // pred_check
        %p344 = pneg %p240
      $region42: #{sentence_pair_classifier_forward.1} parent=11 // pred_check_branch
        %346 = sbr.rel (%p344) target = $region44
      $region43: #{sentence_pair_classifier_forward.1} parent=11 // pred_region
        _
      $region44: #{sentence_pair_classifier_forward.1} parent=11 // pred_fallthru
        _
      // Predicated region
      $region45: #{sentence_pair_classifier_forward.1} parent=11 // pred_check
        %p347 = pneg %p261
      $region46: #{sentence_pair_classifier_forward.1} parent=11 // pred_check_branch
        %349 = sbr.rel (%p347) target = $region48
      $region47: #{sentence_pair_classifier_forward.1} parent=11 // pred_region
        _
      $region48: #{sentence_pair_classifier_forward.1} parent=11 // pred_fallthru
        _
      // Predicated region
      $region49: #{sentence_pair_classifier_forward.1} parent=11 // pred_check
        %p350 = pneg %p282
      $region50: #{sentence_pair_classifier_forward.1} parent=11 // pred_check_branch
        %352 = sbr.rel (%p350) target = $region52
      $region51: #{sentence_pair_classifier_forward.1} parent=11 // pred_region
        _
      $region52: #{sentence_pair_classifier_forward.1} parent=11 // pred_fallthru
        _
    $region12: #{sentence_pair_classifier_forward.1} parent=5 // pred_fallthru
      _
    %p353 = scmp.lt.s32.totalorder %s20, 2
    // Predicated region
    $region53: #{sentence_pair_classifier_forward.1} parent=5 // pred_check
      %p354 = pneg %p353
    $region54: #{sentence_pair_classifier_forward.1} parent=5 // pred_check_branch
      %356 = sbr.rel (%p354) target = $region56
    $region55: #{sentence_pair_classifier_forward.1} parent=5 // pred_region
      // Predicated region
      $region57: #{sentence_pair_classifier_forward.1} parent=55 // pred_check
        %p357 = pneg %p40
      $region58: #{sentence_pair_classifier_forward.1} parent=55 // pred_check_branch
        %359 = sbr.rel (%p357) target = $region60
      $region59: #{sentence_pair_classifier_forward.1} parent=55 // pred_region
        %p360 = scmp.lt.s32.totalorder %s20, 1
        %s361 = scalar_select %p360, %s20, 1
        %s362 = smul.addr %s361, 8
        %s363 = scalar_lea.vmem %s0, %s362
      $region60: #{sentence_pair_classifier_forward.1} parent=55 // pred_fallthru
        _
      // Predicated region
      $region61: #{sentence_pair_classifier_forward.1} parent=55 // pred_check
        %p364 = pneg %p66
      $region62: #{sentence_pair_classifier_forward.1} parent=55 // pred_check_branch
        %366 = sbr.rel (%p364) target = $region64
      $region63: #{sentence_pair_classifier_forward.1} parent=55 // pred_region
        %p367 = scmp.lt.s32.totalorder %s20, 1
        %s368 = scalar_select %p367, %s20, 1
        %s369 = scalar_lea.vmem %s1, %s368
      $region64: #{sentence_pair_classifier_forward.1} parent=55 // pred_fallthru
        _
    $region56: #{sentence_pair_classifier_forward.1} parent=5 // pred_fallthru
      _
    %p370 = scmp.le.s32.totalorder 1, %s20
    %p371 = scmp.lt.s32.totalorder %s20, 3
    %p372 = pnand %p370, %p371
    %p373 = pneg %p372
    // Predicated region
    $region65: #{sentence_pair_classifier_forward.1} parent=5 // pred_check
      _
    $region66: #{sentence_pair_classifier_forward.1} parent=5 // pred_check_branch
      %375 = sbr.rel (%p372) target = $region68
    $region67: #{sentence_pair_classifier_forward.1} parent=5 // pred_region
      %s376 = ssub.s32 %s20, 1
      %p377 = scmp.lt.s32.totalorder %s25, 1
      %s378 = scalar_select %p377, %s25, 1
      %s379 = smul.addr %s378, 8
      %s380 = scalar_lea.vmem %s0, %s379
      %p381 = pneg %p46
      %p382 = pneg %p43
      %p383 = scmp.lt.s32.totalorder %s25, 1
      %s384 = scalar_select %p383, %s25, 1
      %s385 = scalar_lea.vmem %s1, %s384
      %p386 = pneg %p72
      %p387 = pneg %p69
      %p388 = pneg %p93
      %p389 = pneg %p90
      %p390 = pneg %p114
      %p391 = pneg %p111
      %p392 = pneg %p135
      %p393 = pneg %p132
      %p394 = pneg %p156
      %p395 = pneg %p153
      %p396 = pneg %p177
      %p397 = pneg %p174
      %p398 = pneg %p198
      %p399 = pneg %p195
      %p400 = pneg %p219
      %p401 = pneg %p216
      %p402 = pneg %p240
      %p403 = pneg %p237
      %p404 = pneg %p261
      %p405 = pneg %p258
      %p406 = pneg %p282
      %p407 = pneg %p279
      %p408 = pneg %p308
      %p409 = pneg %p305
      %p410 = scmp.lt.s32.totalorder %s25, 1
      %s411 = scalar_select %p410, %s25, 1
      %s412 = scalar_lea.vmem %s12, %s411
      %p413 = scmp.lt.s32.totalorder %s25, 1
      %s414 = scalar_select %p413, %s25, 1
      %s415 = smul.addr %s414, 8
      %s416 = scalar_lea.vmem %s0, %s415
      %p417 = scmp.lt.s32.totalorder %s25, 1
      %s418 = scalar_select %p417, %s25, 1
      %s419 = scalar_lea.vmem %s1, %s418
      %p420 = scmp.lt.s32.totalorder %s25, 1
      %s421 = scalar_select %p420, %s25, 1
      %s422 = scalar_lea.vmem %s12, %s421
      %v424 = vld [vmem:[%s416] sm:$0xff]
      %v425 = vld [vmem:[%s419] sm:$0x1]
      %v426 = vpack.c.bf16 %v424, %v424
      %v427 = vld [vmem:[%s2] sm:$0xf]
      %v428 = vld [vmem:[%s2 + $0x4] sm:$0xf]
      %v429 = vld [vmem:[%s2 + $0x8] sm:$0xf]
      %v430 = vld [vmem:[%s2 + $0xc] sm:$0xf]
      %v431 = vld [vmem:[%s6] sm:$0x1]
      %v433 = vlaneseq
      %v434 = vshrl.u32 %v433, 7
      %v435 = vsub.s32 0, %v434
      %v436 = vrot.slane %v431, %v435
      %v442 = vunpack.c.l.b16 %v427
      %v443 = vunpack.c.l.b16 %v428
      %v444 = vunpack.c.l.b16 %v429
      %v445 = vunpack.c.l.b16 %v430
      %v446 = vpack.c.b16 %v443, %v442
      %v447 = vpack.c.b16 %v445, %v444
      %vm450 = vcmask 261120
      %v452 = vsel %vm450, %v426, 0
      %454 = vmatprep.subr.bf16.mxu0 0
      %455 = vmatpush1.bf16.msra.mxu0 0
      %456 = vmatprep.subr.bf16.mxu0 0
      %457 = vmatpush1.bf16.msra.mxu0 0
      %458 = vmatprep.subr.bf16.mxu0 0
      %459 = vmatpush1.bf16.msra.mxu0 0
      %460 = vmatprep.subr.bf16.mxu0 0
      %461 = vmatpush1.bf16.msra.mxu0 0
      %462 = vmatprep.subr.bf16.mxu0 0
      %463 = vmatpush1.bf16.msra.mxu0 0
      %464 = vmatprep.subr.bf16.mxu0 0
      %465 = vmatpush1.bf16.msra.mxu0 0
      %466 = vmatprep.subr.bf16.mxu0 0
      %467 = vmatpush1.bf16.msra.mxu0 %v447
      %468 = vmatprep.subr.bf16.mxu0 0
      %469 = vmatpush1.bf16.msra.mxu0 %v446
      %470 = vmatprep.subr.bf16.mxu0 0
      %471 = vmatpush2.bf16.msra.mxu0 0
      %472 = vmatprep.subr.bf16.mxu0 0
      %473 = vmatpush2.bf16.msra.mxu0 0
      %474 = vmatprep.subr.bf16.mxu0 0
      %475 = vmatpush2.bf16.msra.mxu0 0
      %476 = vmatprep.subr.bf16.mxu0 0
      %477 = vmatpush2.bf16.msra.mxu0 0
      %478 = vmatprep.subr.bf16.mxu0 0
      %479 = vmatpush2.bf16.msra.mxu0 0
      %480 = vmatprep.subr.bf16.mxu0 0
      %481 = vmatpush2.bf16.msra.mxu0 0
      %482 = vmatprep.subr.bf16.mxu0 0
      %483 = vmatpush2.bf16.msra.mxu0 0
      %484 = vmatprep.subr.bf16.mxu0 0
      %485 = vmatpush2.bf16.msra.mxu0 0
      %486 = vmatprep.mubr.bf16.mxu0 0
      %487 = vmatmul.mubr.bf16.gmra.mxu0 %v452
      %v488 = vpop.f32.mrf.mxu0
      %v489 = vadd.f32 %v436, %v488
      %v490 = vpop.f32.mrf.mxu0
      %v491 = vpop.f32.mrf.mxu0
      %v492 = vpop.f32.mrf.mxu0
      %493 = vdwg.mxu0
      %v494 = vpack.c.bf16 %v489, %v489
      %v496 = vlaneseq
      %v497 = vshrl.u32 %v496, 7
      %v498 = vsub.s32 0, %v497
      %v499 = vrot.slane %v425, %v498
      %502 = vrot.lane.b32.xlu0 %v494, 96
      %v503 = vpop.permute.xlu0 %502
      %vm504 = vcmask 64512
      %v506 = vsel %vm504, %v494, 0
      %v509 = vsel %vm504, %v503, 0
      %511 = vmatprep.subr.bf16.mxu0 0
      %512 = vmatpush1.bf16.xpose.msra.mxu0 0
      %513 = vmatprep.subr.bf16.mxu0 0
      %514 = vmatpush1.bf16.xpose.msra.mxu0 0
      %515 = vmatprep.subr.bf16.mxu0 0
      %516 = vmatpush1.bf16.xpose.msra.mxu0 0
      %517 = vmatprep.subr.bf16.mxu0 0
      %518 = vmatpush1.bf16.xpose.msra.mxu0 0
      %519 = vmatprep.subr.bf16.mxu0 0
      %520 = vmatpush1.bf16.xpose.msra.mxu0 0
      %521 = vmatprep.subr.bf16.mxu0 0
      %522 = vmatpush1.bf16.xpose.msra.mxu0 0
      %523 = vmatprep.subr.bf16.mxu0 0
      %524 = vmatpush1.bf16.xpose.msra.mxu0 0
      %525 = vmatprep.subr.bf16.mxu0 0
      %526 = vmatpush1.bf16.xpose.msra.mxu0 %v509
      %527 = vmatprep.subr.bf16.mxu0 0
      %528 = vmatpush2.bf16.xpose.msra.mxu0 0
      %529 = vmatprep.subr.bf16.mxu0 0
      %530 = vmatpush2.bf16.xpose.msra.mxu0 0
      %531 = vmatprep.subr.bf16.mxu0 0
      %532 = vmatpush2.bf16.xpose.msra.mxu0 0
      %533 = vmatprep.subr.bf16.mxu0 0
      %534 = vmatpush2.bf16.xpose.msra.mxu0 0
      %535 = vmatprep.subr.bf16.mxu0 0
      %536 = vmatpush2.bf16.xpose.msra.mxu0 0
      %537 = vmatprep.subr.bf16.mxu0 0
      %538 = vmatpush2.bf16.xpose.msra.mxu0 0
      %539 = vmatprep.subr.bf16.mxu0 0
      %540 = vmatpush2.bf16.xpose.msra.mxu0 0
      %541 = vmatprep.subr.bf16.mxu0 0
      %542 = vmatpush2.bf16.xpose.msra.mxu0 0
      %543 = vmatprep.mubr.bf16.mxu0 0
      %544 = vmatmul.mubr.bf16.gmra.mxu0 %v506
      %v545 = vpop.f32.mrf.mxu0
      %v546 = vadd.f32 %v499, %v545
      %v547 = vpop.f32.mrf.mxu0
      %v548 = vpop.f32.mrf.mxu0
      %v549 = vpop.f32.mrf.mxu0
      %550 = vdwg.mxu0
      %v551 = vsel %vm504, %v546, -inf
      %552 = vmax.xlane.f32.xlu0 %v551
      %v553 = vpop.xlane.xlu0 %552
      %v554 = vsub.f32 %v546, %v553
      %v555 = vmul.f32 %v554, 1.442695
      %v556 = vpow.pop %v555
      %v557 = vsel %vm504, %v556, 0.0
      %558 = vadd.xlane.f32.xlu0 %v557
      %v559 = vpop.xlane.xlu0 %558
      %v560 = vrcp.pop %v559
      %v561 = vmul.f32 %v556, %v560
      %v562 = vpack.c.bf16 %v561, %v561
      %563 = vrot.lane.b32.xlu0 %v494, 64
      %v564 = vpop.permute.xlu0 %563
      %v566 = vsel %vm504, %v562, 0
      %vm568 = vcmask 1043456
      %v570 = vsel %vm568, %v564, 0
      %572 = vmatprep.subr.bf16.mxu0 0
      %573 = vmatpush1.bf16.msra.mxu0 0
      %574 = vmatprep.subr.bf16.mxu0 0
      %575 = vmatpush1.bf16.msra.mxu0 0
      %576 = vmatprep.subr.bf16.mxu0 0
      %577 = vmatpush1.bf16.msra.mxu0 0
      %578 = vmatprep.subr.bf16.mxu0 0
      %579 = vmatpush1.bf16.msra.mxu0 0
      %580 = vmatprep.subr.bf16.mxu0 0
      %581 = vmatpush1.bf16.msra.mxu0 0
      %582 = vmatprep.subr.bf16.mxu0 0
      %583 = vmatpush1.bf16.msra.mxu0 0
      %584 = vmatprep.subr.bf16.mxu0 0
      %585 = vmatpush1.bf16.msra.mxu0 0
      %586 = vmatprep.subr.bf16.mxu0 0
      %587 = vmatpush1.bf16.msra.mxu0 %v570
      %588 = vmatprep.subr.bf16.mxu0 0
      %589 = vmatpush2.bf16.msra.mxu0 0
      %590 = vmatprep.subr.bf16.mxu0 0
      %591 = vmatpush2.bf16.msra.mxu0 0
      %592 = vmatprep.subr.bf16.mxu0 0
      %593 = vmatpush2.bf16.msra.mxu0 0
      %594 = vmatprep.subr.bf16.mxu0 0
      %595 = vmatpush2.bf16.msra.mxu0 0
      %596 = vmatprep.subr.bf16.mxu0 0
      %597 = vmatpush2.bf16.msra.mxu0 0
      %598 = vmatprep.subr.bf16.mxu0 0
      %599 = vmatpush2.bf16.msra.mxu0 0
      %600 = vmatprep.subr.bf16.mxu0 0
      %601 = vmatpush2.bf16.msra.mxu0 0
      %602 = vmatprep.subr.bf16.mxu0 0
      %603 = vmatpush2.bf16.msra.mxu0 0
      %604 = vmatprep.mubr.bf16.mxu0 0
      %605 = vmatmul.mubr.bf16.gmra.mxu0 %v566
      %v606 = vpop.f32.mrf.mxu0
      %v607 = vadd.f32 0.0, %v606
      %v608 = vpop.f32.mrf.mxu0
      %v609 = vpop.f32.mrf.mxu0
      %v610 = vpop.f32.mrf.mxu0
      %611 = vdwg.mxu0
      %612 = vrot.lane.b32.xlu0 %v494, 120
      %v613 = vpop.permute.xlu0 %612
      %614 = vrot.lane.b32.xlu0 %v494, 88
      %v615 = vpop.permute.xlu0 %614
      %v617 = vsel %vm504, %v613, 0
      %v620 = vsel %vm504, %v615, 0
      %622 = vmatprep.subr.bf16.mxu0 0
      %623 = vmatpush1.bf16.xpose.msra.mxu0 0
      %624 = vmatprep.subr.bf16.mxu0 0
      %625 = vmatpush1.bf16.xpose.msra.mxu0 0
      %626 = vmatprep.subr.bf16.mxu0 0
      %627 = vmatpush1.bf16.xpose.msra.mxu0 0
      %628 = vmatprep.subr.bf16.mxu0 0
      %629 = vmatpush1.bf16.xpose.msra.mxu0 0
      %630 = vmatprep.subr.bf16.mxu0 0
      %631 = vmatpush1.bf16.xpose.msra.mxu0 0
      %632 = vmatprep.subr.bf16.mxu0 0
      %633 = vmatpush1.bf16.xpose.msra.mxu0 0
      %634 = vmatprep.subr.bf16.mxu0 0
      %635 = vmatpush1.bf16.xpose.msra.mxu0 0
      %636 = vmatprep.subr.bf16.mxu0 0
      %637 = vmatpush1.bf16.xpose.msra.mxu0 %v620
      %638 = vmatprep.subr.bf16.mxu0 0
      %639 = vmatpush2.bf16.xpose.msra.mxu0 0
      %640 = vmatprep.subr.bf16.mxu0 0
      %641 = vmatpush2.bf16.xpose.msra.mxu0 0
      %642 = vmatprep.subr.bf16.mxu0 0
      %643 = vmatpush2.bf16.xpose.msra.mxu0 0
      %644 = vmatprep.subr.bf16.mxu0 0
      %645 = vmatpush2.bf16.xpose.msra.mxu0 0
      %646 = vmatprep.subr.bf16.mxu0 0
      %647 = vmatpush2.bf16.xpose.msra.mxu0 0
      %648 = vmatprep.subr.bf16.mxu0 0
      %649 = vmatpush2.bf16.xpose.msra.mxu0 0
      %650 = vmatprep.subr.bf16.mxu0 0
      %651 = vmatpush2.bf16.xpose.msra.mxu0 0
      %652 = vmatprep.subr.bf16.mxu0 0
      %653 = vmatpush2.bf16.xpose.msra.mxu0 0
      %654 = vmatprep.mubr.bf16.mxu0 0
      %655 = vmatmul.mubr.bf16.gmra.mxu0 %v617
      %v656 = vpop.f32.mrf.mxu0
      %v657 = vadd.f32 %v499, %v656
      %v658 = vpop.f32.mrf.mxu0
      %v659 = vpop.f32.mrf.mxu0
      %v660 = vpop.f32.mrf.mxu0
      %661 = vdwg.mxu0
      %v662 = vsel %vm504, %v657, -inf
      %663 = vmax.xlane.f32.xlu0 %v662
      %v664 = vpop.xlane.xlu0 %663
      %v665 = vsub.f32 %v657, %v664
      %v666 = vmul.f32 %v665, 1.442695
      %v667 = vpow.pop %v666
      %v668 = vsel %vm504, %v667, 0.0
      %669 = vadd.xlane.f32.xlu0 %v668
      %v670 = vpop.xlane.xlu0 %669
      %v671 = vrcp.pop %v670
      %v672 = vmul.f32 %v667, %v671
      %v673 = vpack.c.bf16 %v672, %v672
      %674 = vrot.lane.b32.xlu0 %v494, 56
      %v675 = vpop.permute.xlu0 %674
      %v677 = vsel %vm504, %v673, 0
      %v680 = vsel %vm568, %v675, 0
      %682 = vmatprep.subr.bf16.mxu0 0
      %683 = vmatpush1.bf16.msra.mxu0 0
      %684 = vmatprep.subr.bf16.mxu0 0
      %685 = vmatpush1.bf16.msra.mxu0 0
      %686 = vmatprep.subr.bf16.mxu0 0
      %687 = vmatpush1.bf16.msra.mxu0 0
      %688 = vmatprep.subr.bf16.mxu0 0
      %689 = vmatpush1.bf16.msra.mxu0 0
      %690 = vmatprep.subr.bf16.mxu0 0
      %691 = vmatpush1.bf16.msra.mxu0 0
      %692 = vmatprep.subr.bf16.mxu0 0
      %693 = vmatpush1.bf16.msra.mxu0 0
      %694 = vmatprep.subr.bf16.mxu0 0
      %695 = vmatpush1.bf16.msra.mxu0 0
      %696 = vmatprep.subr.bf16.mxu0 0
      %697 = vmatpush1.bf16.msra.mxu0 %v680
      %698 = vmatprep.subr.bf16.mxu0 0
      %699 = vmatpush2.bf16.msra.mxu0 0
      %700 = vmatprep.subr.bf16.mxu0 0
      %701 = vmatpush2.bf16.msra.mxu0 0
      %702 = vmatprep.subr.bf16.mxu0 0
      %703 = vmatpush2.bf16.msra.mxu0 0
      %704 = vmatprep.subr.bf16.mxu0 0
      %705 = vmatpush2.bf16.msra.mxu0 0
      %706 = vmatprep.subr.bf16.mxu0 0
      %707 = vmatpush2.bf16.msra.mxu0 0
      %708 = vmatprep.subr.bf16.mxu0 0
      %709 = vmatpush2.bf16.msra.mxu0 0
      %710 = vmatprep.subr.bf16.mxu0 0
      %711 = vmatpush2.bf16.msra.mxu0 0
      %712 = vmatprep.subr.bf16.mxu0 0
      %713 = vmatpush2.bf16.msra.mxu0 0
      %714 = vmatprep.mubr.bf16.mxu0 0
      %715 = vmatmul.mubr.bf16.gmra.mxu0 %v677
      %v716 = vpop.f32.mrf.mxu0
      %v717 = vadd.f32 0.0, %v716
      %v718 = vpop.f32.mrf.mxu0
      %v719 = vpop.f32.mrf.mxu0
      %v720 = vpop.f32.mrf.mxu0
      %721 = vdwg.mxu0
      %722 = vrot.lane.b32.xlu0 %v494, 112
      %v723 = vpop.permute.xlu0 %722
      %724 = vrot.lane.b32.xlu0 %v494, 80
      %v725 = vpop.permute.xlu0 %724
      %v727 = vsel %vm504, %v723, 0
      %v730 = vsel %vm504, %v725, 0
      %732 = vmatprep.subr.bf16.mxu0 0
      %733 = vmatpush1.bf16.xpose.msra.mxu0 0
      %734 = vmatprep.subr.bf16.mxu0 0
      %735 = vmatpush1.bf16.xpose.msra.mxu0 0
      %736 = vmatprep.subr.bf16.mxu0 0
      %737 = vmatpush1.bf16.xpose.msra.mxu0 0
      %738 = vmatprep.subr.bf16.mxu0 0
      %739 = vmatpush1.bf16.xpose.msra.mxu0 0
      %740 = vmatprep.subr.bf16.mxu0 0
      %741 = vmatpush1.bf16.xpose.msra.mxu0 0
      %742 = vmatprep.subr.bf16.mxu0 0
      %743 = vmatpush1.bf16.xpose.msra.mxu0 0
      %744 = vmatprep.subr.bf16.mxu0 0
      %745 = vmatpush1.bf16.xpose.msra.mxu0 0
      %746 = vmatprep.subr.bf16.mxu0 0
      %747 = vmatpush1.bf16.xpose.msra.mxu0 %v730
      %748 = vmatprep.subr.bf16.mxu0 0
      %749 = vmatpush2.bf16.xpose.msra.mxu0 0
      %750 = vmatprep.subr.bf16.mxu0 0
      %751 = vmatpush2.bf16.xpose.msra.mxu0 0
      %752 = vmatprep.subr.bf16.mxu0 0
      %753 = vmatpush2.bf16.xpose.msra.mxu0 0
      %754 = vmatprep.subr.bf16.mxu0 0
      %755 = vmatpush2.bf16.xpose.msra.mxu0 0
      %756 = vmatprep.subr.bf16.mxu0 0
      %757 = vmatpush2.bf16.xpose.msra.mxu0 0
      %758 = vmatprep.subr.bf16.mxu0 0
      %759 = vmatpush2.bf16.xpose.msra.mxu0 0
      %760 = vmatprep.subr.bf16.mxu0 0
      %761 = vmatpush2.bf16.xpose.msra.mxu0 0
      %762 = vmatprep.subr.bf16.mxu0 0
      %763 = vmatpush2.bf16.xpose.msra.mxu0 0
      %764 = vmatprep.mubr.bf16.mxu0 0
      %765 = vmatmul.mubr.bf16.gmra.mxu0 %v727
      %v766 = vpop.f32.mrf.mxu0
      %v767 = vadd.f32 %v499, %v766
      %v768 = vpop.f32.mrf.mxu0
      %v769 = vpop.f32.mrf.mxu0
      %v770 = vpop.f32.mrf.mxu0
      %771 = vdwg.mxu0
      %v772 = vsel %vm504, %v767, -inf
      %773 = vmax.xlane.f32.xlu0 %v772
      %v774 = vpop.xlane.xlu0 %773
      %v775 = vsub.f32 %v767, %v774
      %v776 = vmul.f32 %v775, 1.442695
      %v777 = vpow.pop %v776
      %v778 = vsel %vm504, %v777, 0.0
      %779 = vadd.xlane.f32.xlu0 %v778
      %v780 = vpop.xlane.xlu0 %779
      %v781 = vrcp.pop %v780
      %v782 = vmul.f32 %v777, %v781
      %v783 = vpack.c.bf16 %v782, %v782
      %784 = vrot.lane.b32.xlu0 %v494, 48
      %v785 = vpop.permute.xlu0 %784
      %v787 = vsel %vm504, %v783, 0
      %v790 = vsel %vm568, %v785, 0
      %792 = vmatprep.subr.bf16.mxu0 0
      %793 = vmatpush1.bf16.msra.mxu0 0
      %794 = vmatprep.subr.bf16.mxu0 0
      %795 = vmatpush1.bf16.msra.mxu0 0
      %796 = vmatprep.subr.bf16.mxu0 0
      %797 = vmatpush1.bf16.msra.mxu0 0
      %798 = vmatprep.subr.bf16.mxu0 0
      %799 = vmatpush1.bf16.msra.mxu0 0
      %800 = vmatprep.subr.bf16.mxu0 0
      %801 = vmatpush1.bf16.msra.mxu0 0
      %802 = vmatprep.subr.bf16.mxu0 0
      %803 = vmatpush1.bf16.msra.mxu0 0
      %804 = vmatprep.subr.bf16.mxu0 0
      %805 = vmatpush1.bf16.msra.mxu0 0
      %806 = vmatprep.subr.bf16.mxu0 0
      %807 = vmatpush1.bf16.msra.mxu0 %v790
      %808 = vmatprep.subr.bf16.mxu0 0
      %809 = vmatpush2.bf16.msra.mxu0 0
      %810 = vmatprep.subr.bf16.mxu0 0
      %811 = vmatpush2.bf16.msra.mxu0 0
      %812 = vmatprep.subr.bf16.mxu0 0
      %813 = vmatpush2.bf16.msra.mxu0 0
      %814 = vmatprep.subr.bf16.mxu0 0
      %815 = vmatpush2.bf16.msra.mxu0 0
      %816 = vmatprep.subr.bf16.mxu0 0
      %817 = vmatpush2.bf16.msra.mxu0 0
      %818 = vmatprep.subr.bf16.mxu0 0
      %819 = vmatpush2.bf16.msra.mxu0 0
      %820 = vmatprep.subr.bf16.mxu0 0
      %821 = vmatpush2.bf16.msra.mxu0 0
      %822 = vmatprep.subr.bf16.mxu0 0
      %823 = vmatpush2.bf16.msra.mxu0 0
      %824 = vmatprep.mubr.bf16.mxu0 0
      %825 = vmatmul.mubr.bf16.gmra.mxu0 %v787
      %v826 = vpop.f32.mrf.mxu0
      %v827 = vadd.f32 0.0, %v826
      %v828 = vpop.f32.mrf.mxu0
      %v829 = vpop.f32.mrf.mxu0
      %v830 = vpop.f32.mrf.mxu0
      %831 = vdwg.mxu0
      %832 = vrot.lane.b32.xlu0 %v494, 104
      %v833 = vpop.permute.xlu0 %832
      %834 = vrot.lane.b32.xlu0 %v494, 72
      %v835 = vpop.permute.xlu0 %834
      %v837 = vsel %vm504, %v833, 0
      %v840 = vsel %vm504, %v835, 0
      %842 = vmatprep.subr.bf16.mxu0 0
      %843 = vmatpush1.bf16.xpose.msra.mxu0 0
      %844 = vmatprep.subr.bf16.mxu0 0
      %845 = vmatpush1.bf16.xpose.msra.mxu0 0
      %846 = vmatprep.subr.bf16.mxu0 0
      %847 = vmatpush1.bf16.xpose.msra.mxu0 0
      %848 = vmatprep.subr.bf16.mxu0 0
      %849 = vmatpush1.bf16.xpose.msra.mxu0 0
      %850 = vmatprep.subr.bf16.mxu0 0
      %851 = vmatpush1.bf16.xpose.msra.mxu0 0
      %852 = vmatprep.subr.bf16.mxu0 0
      %853 = vmatpush1.bf16.xpose.msra.mxu0 0
      %854 = vmatprep.subr.bf16.mxu0 0
      %855 = vmatpush1.bf16.xpose.msra.mxu0 0
      %856 = vmatprep.subr.bf16.mxu0 0
      %857 = vmatpush1.bf16.xpose.msra.mxu0 %v840
      %858 = vmatprep.subr.bf16.mxu0 0
      %859 = vmatpush2.bf16.xpose.msra.mxu0 0
      %860 = vmatprep.subr.bf16.mxu0 0
      %861 = vmatpush2.bf16.xpose.msra.mxu0 0
      %862 = vmatprep.subr.bf16.mxu0 0
      %863 = vmatpush2.bf16.xpose.msra.mxu0 0
      %864 = vmatprep.subr.bf16.mxu0 0
      %865 = vmatpush2.bf16.xpose.msra.mxu0 0
      %866 = vmatprep.subr.bf16.mxu0 0
      %867 = vmatpush2.bf16.xpose.msra.mxu0 0
      %868 = vmatprep.subr.bf16.mxu0 0
      %869 = vmatpush2.bf16.xpose.msra.mxu0 0
      %870 = vmatprep.subr.bf16.mxu0 0
      %871 = vmatpush2.bf16.xpose.msra.mxu0 0
      %872 = vmatprep.subr.bf16.mxu0 0
      %873 = vmatpush2.bf16.xpose.msra.mxu0 0
      %874 = vmatprep.mubr.bf16.mxu0 0
      %875 = vmatmul.mubr.bf16.gmra.mxu0 %v837
      %v876 = vpop.f32.mrf.mxu0
      %v877 = vadd.f32 %v499, %v876
      %v878 = vpop.f32.mrf.mxu0
      %v879 = vpop.f32.mrf.mxu0
      %v880 = vpop.f32.mrf.mxu0
      %881 = vdwg.mxu0
      %v882 = vsel %vm504, %v877, -inf
      %883 = vmax.xlane.f32.xlu0 %v882
      %v884 = vpop.xlane.xlu0 %883
      %v885 = vsub.f32 %v877, %v884
      %v886 = vmul.f32 %v885, 1.442695
      %v887 = vpow.pop %v886
      %v888 = vsel %vm504, %v887, 0.0
      %889 = vadd.xlane.f32.xlu0 %v888
      %v890 = vpop.xlane.xlu0 %889
      %v891 = vrcp.pop %v890
      %v892 = vmul.f32 %v887, %v891
      %v893 = vpack.c.bf16 %v892, %v892
      %894 = vrot.lane.b32.xlu0 %v494, 40
      %v895 = vpop.permute.xlu0 %894
      %v897 = vsel %vm504, %v893, 0
      %v900 = vsel %vm568, %v895, 0
      %902 = vmatprep.subr.bf16.mxu0 0
      %903 = vmatpush1.bf16.msra.mxu0 0
      %904 = vmatprep.subr.bf16.mxu0 0
      %905 = vmatpush1.bf16.msra.mxu0 0
      %906 = vmatprep.subr.bf16.mxu0 0
      %907 = vmatpush1.bf16.msra.mxu0 0
      %908 = vmatprep.subr.bf16.mxu0 0
      %909 = vmatpush1.bf16.msra.mxu0 0
      %910 = vmatprep.subr.bf16.mxu0 0
      %911 = vmatpush1.bf16.msra.mxu0 0
      %912 = vmatprep.subr.bf16.mxu0 0
      %913 = vmatpush1.bf16.msra.mxu0 0
      %914 = vmatprep.subr.bf16.mxu0 0
      %915 = vmatpush1.bf16.msra.mxu0 0
      %916 = vmatprep.subr.bf16.mxu0 0
      %917 = vmatpush1.bf16.msra.mxu0 %v900
      %918 = vmatprep.subr.bf16.mxu0 0
      %919 = vmatpush2.bf16.msra.mxu0 0
      %920 = vmatprep.subr.bf16.mxu0 0
      %921 = vmatpush2.bf16.msra.mxu0 0
      %922 = vmatprep.subr.bf16.mxu0 0
      %923 = vmatpush2.bf16.msra.mxu0 0
      %924 = vmatprep.subr.bf16.mxu0 0
      %925 = vmatpush2.bf16.msra.mxu0 0
      %926 = vmatprep.subr.bf16.mxu0 0
      %927 = vmatpush2.bf16.msra.mxu0 0
      %928 = vmatprep.subr.bf16.mxu0 0
      %929 = vmatpush2.bf16.msra.mxu0 0
      %930 = vmatprep.subr.bf16.mxu0 0
      %931 = vmatpush2.bf16.msra.mxu0 0
      %932 = vmatprep.subr.bf16.mxu0 0
      %933 = vmatpush2.bf16.msra.mxu0 0
      %934 = vmatprep.mubr.bf16.mxu0 0
      %935 = vmatmul.mubr.bf16.gmra.mxu0 %v897
      %v936 = vpop.f32.mrf.mxu0
      %v937 = vadd.f32 0.0, %v936
      %v938 = vpop.f32.mrf.mxu0
      %v939 = vpop.f32.mrf.mxu0
      %v940 = vpop.f32.mrf.mxu0
      %941 = vdwg.mxu0
      %943 = vrot.lane.b32.xlu0 %v717, 8
      %v944 = vpop.permute.xlu0 %943
      %947 = vrot.lane.b32.xlu0 %v827, 16
      %v948 = vpop.permute.xlu0 %947
      %951 = vrot.lane.b32.xlu0 %v937, 24
      %v952 = vpop.permute.xlu0 %951
      %v954 = vsel %vm504, %v607, %v944
      %vm955 = vcmask 130048
      %v956 = vsel %vm955, %v954, %v948
      %vm957 = vcmask 195584
      %v958 = vsel %vm957, %v956, %v952
      %v959 = vpack.c.bf16 %v958, %v958
      %v960 = vld [vmem:[%s3] sm:$0xf]
      %v961 = vld [vmem:[%s3 + $0x4] sm:$0xf]
      %v962 = vld [vmem:[%s3 + $0x8] sm:$0xf]
      %v963 = vld [vmem:[%s3 + $0xc] sm:$0xf]
      %v964 = vld [vmem:[%s7] sm:$0x1]
      %v965 = vlaneseq
      %v966 = vshrl.u32 %v965, 7
      %v967 = vsub.s32 0, %v966
      %v968 = vrot.slane %v964, %v967
      %v973 = vunpack.c.l.b16 %v960
      %v974 = vunpack.c.l.b16 %v961
      %v975 = vunpack.c.l.b16 %v962
      %v976 = vunpack.c.l.b16 %v963
      %v977 = vpack.c.b16 %v974, %v973
      %v978 = vpack.c.b16 %v976, %v975
      %v982 = vsel %vm450, %v959, 0
      %984 = vmatprep.subr.bf16.mxu0 0
      %985 = vmatpush1.bf16.msra.mxu0 0
      %986 = vmatprep.subr.bf16.mxu0 0
      %987 = vmatpush1.bf16.msra.mxu0 0
      %988 = vmatprep.subr.bf16.mxu0 0
      %989 = vmatpush1.bf16.msra.mxu0 0
      %990 = vmatprep.subr.bf16.mxu0 0
      %991 = vmatpush1.bf16.msra.mxu0 0
      %992 = vmatprep.subr.bf16.mxu0 0
      %993 = vmatpush1.bf16.msra.mxu0 0
      %994 = vmatprep.subr.bf16.mxu0 0
      %995 = vmatpush1.bf16.msra.mxu0 0
      %996 = vmatprep.subr.bf16.mxu0 0
      %997 = vmatpush1.bf16.msra.mxu0 %v978
      %998 = vmatprep.subr.bf16.mxu0 0
      %999 = vmatpush1.bf16.msra.mxu0 %v977
      %1000 = vmatprep.subr.bf16.mxu0 0
      %1001 = vmatpush2.bf16.msra.mxu0 0
      %1002 = vmatprep.subr.bf16.mxu0 0
      %1003 = vmatpush2.bf16.msra.mxu0 0
      %1004 = vmatprep.subr.bf16.mxu0 0
      %1005 = vmatpush2.bf16.msra.mxu0 0
      %1006 = vmatprep.subr.bf16.mxu0 0
      %1007 = vmatpush2.bf16.msra.mxu0 0
      %1008 = vmatprep.subr.bf16.mxu0 0
      %1009 = vmatpush2.bf16.msra.mxu0 0
      %1010 = vmatprep.subr.bf16.mxu0 0
      %1011 = vmatpush2.bf16.msra.mxu0 0
      %1012 = vmatprep.subr.bf16.mxu0 0
      %1013 = vmatpush2.bf16.msra.mxu0 0
      %1014 = vmatprep.subr.bf16.mxu0 0
      %1015 = vmatpush2.bf16.msra.mxu0 0
      %1016 = vmatprep.mubr.bf16.mxu0 0
      %1017 = vmatmul.mubr.bf16.gmra.mxu0 %v982
      %v1018 = vpop.f32.mrf.mxu0
      %v1019 = vadd.f32 %v968, %v1018
      %v1020 = vpop.f32.mrf.mxu0
      %v1021 = vpop.f32.mrf.mxu0
      %v1022 = vpop.f32.mrf.mxu0
      %1023 = vdwg.mxu0
      %v1024 = vadd.f32 %v424, %v1019
      %v1025 = vld [vmem:[%s7 + $0x2] sm:$0x1]
      %v1026 = vld [vmem:[%s7 + $0x3] sm:$0x1]
      %v1027 = vsel %vm450, %v1024, 0.0
      %1028 = vadd.xlane.f32.xlu0 %v1027
      %v1029 = vpop.xlane.xlu0 %1028
      %v1030 = vrcp.pop 32.0
      %v1031 = vmul.f32 %v1029, %v1030
      %v1032 = vsub.f32 %v1024, %v1031
      %v1033 = vmul.f32 %v1032, %v1032
      %v1034 = vsel %vm450, %v1033, 0.0
      %1035 = vadd.xlane.f32.xlu0 %v1034
      %v1036 = vpop.xlane.xlu0 %1035
      %v1037 = vmul.f32 %v1036, %v1030
      %v1038 = vadd.f32 %v1037, 1e-12
      %v1039 = vrsqrt.pop %v1038
      %v1040 = vmul.f32 %v1032, %v1039
      %v1041 = vlaneseq
      %v1042 = vshrl.u32 %v1041, 7
      %v1043 = vsub.s32 0, %v1042
      %v1044 = vrot.slane %v1025, %v1043
      %v1045 = vmul.f32 %v1040, %v1044
      %v1046 = vlaneseq
      %v1047 = vshrl.u32 %v1046, 7
      %v1048 = vsub.s32 0, %v1047
      %v1049 = vrot.slane %v1026, %v1048
      %v1050 = vadd.f32 %v1045, %v1049
      %v1051 = vpack.c.bf16 %v1050, %v1050
      %v1052 = vld [vmem:[%s4] sm:$0xf]
      %v1053 = vld [vmem:[%s4 + $0x4] sm:$0xf]
      %v1054 = vld [vmem:[%s4 + $0x8] sm:$0xf]
      %v1055 = vld [vmem:[%s4 + $0xc] sm:$0xf]
      %v1056 = vld [vmem:[%s8] sm:$0x1]
      %v1058 = vlaneseq
      %v1059 = vshrl.u32 %v1058, 7
      %v1060 = vsub.s32 0, %v1059
      %v1061 = vrot.slane %v1056, %v1060
      %v1067 = vunpack.c.l.b16 %v1052
      %v1068 = vunpack.c.l.b16 %v1053
      %v1069 = vunpack.c.l.b16 %v1054
      %v1070 = vunpack.c.l.b16 %v1055
      %v1071 = vpack.c.b16 %v1068, %v1067
      %v1072 = vpack.c.b16 %v1070, %v1069
      %v1076 = vsel %vm450, %v1051, 0
      %1078 = vmatprep.subr.bf16.mxu0 0
      %1079 = vmatpush1.bf16.msra.mxu0 0
      %1080 = vmatprep.subr.bf16.mxu0 0
      %1081 = vmatpush1.bf16.msra.mxu0 0
      %1082 = vmatprep.subr.bf16.mxu0 0
      %1083 = vmatpush1.bf16.msra.mxu0 0
      %1084 = vmatprep.subr.bf16.mxu0 0
      %1085 = vmatpush1.bf16.msra.mxu0 0
      %1086 = vmatprep.subr.bf16.mxu0 0
      %1087 = vmatpush1.bf16.msra.mxu0 0
      %1088 = vmatprep.subr.bf16.mxu0 0
      %1089 = vmatpush1.bf16.msra.mxu0 0
      %1090 = vmatprep.subr.bf16.mxu0 0
      %1091 = vmatpush1.bf16.msra.mxu0 %v1072
      %1092 = vmatprep.subr.bf16.mxu0 0
      %1093 = vmatpush1.bf16.msra.mxu0 %v1071
      %1094 = vmatprep.subr.bf16.mxu0 0
      %1095 = vmatpush2.bf16.msra.mxu0 0
      %1096 = vmatprep.subr.bf16.mxu0 0
      %1097 = vmatpush2.bf16.msra.mxu0 0
      %1098 = vmatprep.subr.bf16.mxu0 0
      %1099 = vmatpush2.bf16.msra.mxu0 0
      %1100 = vmatprep.subr.bf16.mxu0 0
      %1101 = vmatpush2.bf16.msra.mxu0 0
      %1102 = vmatprep.subr.bf16.mxu0 0
      %1103 = vmatpush2.bf16.msra.mxu0 0
      %1104 = vmatprep.subr.bf16.mxu0 0
      %1105 = vmatpush2.bf16.msra.mxu0 0
      %1106 = vmatprep.subr.bf16.mxu0 0
      %1107 = vmatpush2.bf16.msra.mxu0 0
      %1108 = vmatprep.subr.bf16.mxu0 0
      %1109 = vmatpush2.bf16.msra.mxu0 0
      %1110 = vmatprep.mubr.bf16.mxu0 0
      %1111 = vmatmul.mubr.bf16.gmra.mxu0 %v1076
      %v1112 = vpop.f32.mrf.mxu0
      %v1113 = vadd.f32 %v1061, %v1112
      %v1114 = vpop.f32.mrf.mxu0
      %v1115 = vpop.f32.mrf.mxu0
      %v1116 = vpop.f32.mrf.mxu0
      %1117 = vdwg.mxu0
      %v1118 = vmul.f32 %v1113, %v1113
      %v1119 = vmul.f32 %v1113, %v1118
      %v1120 = vmul.f32 %v1119, 0.044715
      %v1121 = vadd.f32 %v1113, %v1120
      %v1122 = vmul.f32 %v1121, 0.7978846
      %v1123 = vtanh.pop %v1122
      %v1124 = vadd.f32 %v1123, 1.0
      %v1125 = vmul.f32 %v1124, 0.5
      %v1126 = vmul.f32 %v1113, %v1125
      %v1127 = vpack.c.bf16 %v1126, %v1126
      %v1128 = vld [vmem:[%s5] sm:$0xf]
      %v1129 = vld [vmem:[%s5 + $0x4] sm:$0xf]
      %v1130 = vld [vmem:[%s5 + $0x8] sm:$0xf]
      %v1131 = vld [vmem:[%s5 + $0xc] sm:$0xf]
      %v1132 = vld [vmem:[%s5 + $0x10] sm:$0xf]
      %v1133 = vld [vmem:[%s5 + $0x14] sm:$0xf]
      %v1134 = vld [vmem:[%s5 + $0x18] sm:$0xf]
      %v1135 = vld [vmem:[%s5 + $0x1c] sm:$0xf]
      %v1136 = vld [vmem:[%s7 + $0x1] sm:$0x1]
      %v1137 = vlaneseq
      %v1138 = vshrl.u32 %v1137, 7
      %v1139 = vsub.s32 0, %v1138
      %v1140 = vrot.slane %v1136, %v1139
      %v1149 = vunpack.c.l.b16 %v1128
      %v1150 = vunpack.c.l.b16 %v1129
      %v1151 = vunpack.c.l.b16 %v1130
      %v1152 = vunpack.c.l.b16 %v1131
      %v1153 = vunpack.c.l.b16 %v1132
      %v1154 = vunpack.c.l.b16 %v1133
      %v1155 = vunpack.c.l.b16 %v1134
      %v1156 = vunpack.c.l.b16 %v1135
      %v1157 = vpack.c.b16 %v1150, %v1149
      %v1158 = vpack.c.b16 %v1152, %v1151
      %v1159 = vpack.c.b16 %v1154, %v1153
      %v1160 = vpack.c.b16 %v1156, %v1155
      %vm1165 = vcmask 523264
      %v1167 = vsel %vm1165, %v1127, 0
      %1169 = vmatprep.subr.bf16.mxu0 0
      %1170 = vmatpush1.bf16.msra.mxu0 0
      %1171 = vmatprep.subr.bf16.mxu0 0
      %1172 = vmatpush1.bf16.msra.mxu0 0
      %1173 = vmatprep.subr.bf16.mxu0 0
      %1174 = vmatpush1.bf16.msra.mxu0 0
      %1175 = vmatprep.subr.bf16.mxu0 0
      %1176 = vmatpush1.bf16.msra.mxu0 0
      %1177 = vmatprep.subr.bf16.mxu0 0
      %1178 = vmatpush1.bf16.msra.mxu0 %v1160
      %1179 = vmatprep.subr.bf16.mxu0 0
      %1180 = vmatpush1.bf16.msra.mxu0 %v1159
      %1181 = vmatprep.subr.bf16.mxu0 0
      %1182 = vmatpush1.bf16.msra.mxu0 %v1158
      %1183 = vmatprep.subr.bf16.mxu0 0
      %1184 = vmatpush1.bf16.msra.mxu0 %v1157
      %1185 = vmatprep.subr.bf16.mxu0 0
      %1186 = vmatpush2.bf16.msra.mxu0 0
      %1187 = vmatprep.subr.bf16.mxu0 0
      %1188 = vmatpush2.bf16.msra.mxu0 0
      %1189 = vmatprep.subr.bf16.mxu0 0
      %1190 = vmatpush2.bf16.msra.mxu0 0
      %1191 = vmatprep.subr.bf16.mxu0 0
      %1192 = vmatpush2.bf16.msra.mxu0 0
      %1193 = vmatprep.subr.bf16.mxu0 0
      %1194 = vmatpush2.bf16.msra.mxu0 0
      %1195 = vmatprep.subr.bf16.mxu0 0
      %1196 = vmatpush2.bf16.msra.mxu0 0
      %1197 = vmatprep.subr.bf16.mxu0 0
      %1198 = vmatpush2.bf16.msra.mxu0 0
      %1199 = vmatprep.subr.bf16.mxu0 0
      %1200 = vmatpush2.bf16.msra.mxu0 0
      %1201 = vmatprep.mubr.bf16.mxu0 0
      %1202 = vmatmul.mubr.bf16.gmra.mxu0 %v1167
      %v1203 = vpop.f32.mrf.mxu0
      %v1204 = vadd.f32 %v1140, %v1203
      %v1205 = vpop.f32.mrf.mxu0
      %v1206 = vpop.f32.mrf.mxu0
      %v1207 = vpop.f32.mrf.mxu0
      %1208 = vdwg.mxu0
      %v1209 = vadd.f32 %v1050, %v1204
      %v1210 = vld [vmem:[%s7 + $0x4] sm:$0x1]
      %v1211 = vld [vmem:[%s7 + $0x5] sm:$0x1]
      %v1212 = vsel %vm450, %v1209, 0.0
      %1213 = vadd.xlane.f32.xlu0 %v1212
      %v1214 = vpop.xlane.xlu0 %1213
      %v1215 = vmul.f32 %v1214, %v1030
      %v1216 = vsub.f32 %v1209, %v1215
      %v1217 = vmul.f32 %v1216, %v1216
      %v1218 = vsel %vm450, %v1217, 0.0
      %1219 = vadd.xlane.f32.xlu0 %v1218
      %v1220 = vpop.xlane.xlu0 %1219
      %v1221 = vmul.f32 %v1220, %v1030
      %v1222 = vadd.f32 %v1221, 1e-12
      %v1223 = vrsqrt.pop %v1222
      %v1224 = vmul.f32 %v1216, %v1223
      %v1225 = vlaneseq
      %v1226 = vshrl.u32 %v1225, 7
      %v1227 = vsub.s32 0, %v1226
      %v1228 = vrot.slane %v1210, %v1227
      %v1229 = vmul.f32 %v1224, %v1228
      %v1230 = vlaneseq
      %v1231 = vshrl.u32 %v1230, 7
      %v1232 = vsub.s32 0, %v1231
      %v1233 = vrot.slane %v1211, %v1232
      %v1234 = vadd.f32 %v1229, %v1233
      %v1235 = vpack.c.bf16 %v1234, %v1234
      %v1236 = vld [vmem:[%s2] sm:$0xf]
      %v1237 = vld [vmem:[%s2 + $0x4] sm:$0xf]
      %v1238 = vld [vmem:[%s2 + $0x8] sm:$0xf]
      %v1239 = vld [vmem:[%s2 + $0xc] sm:$0xf]
      %v1240 = vld [vmem:[%s6] sm:$0x1]
      %v1242 = vlaneseq
      %v1243 = vshrl.u32 %v1242, 7
      %v1244 = vsub.s32 0, %v1243
      %v1245 = vrot.slane %v1240, %v1244
      %v1251 = vunpack.c.l.b16 %v1236
      %v1252 = vunpack.c.l.b16 %v1237
      %v1253 = vunpack.c.l.b16 %v1238
      %v1254 = vunpack.c.l.b16 %v1239
      %v1255 = vpack.c.b16 %v1252, %v1251
      %v1256 = vpack.c.b16 %v1254, %v1253
      %v1260 = vsel %vm450, %v1235, 0
      %1262 = vmatprep.subr.bf16.mxu0 0
      %1263 = vmatpush1.bf16.msra.mxu0 0
      %1264 = vmatprep.subr.bf16.mxu0 0
      %1265 = vmatpush1.bf16.msra.mxu0 0
      %1266 = vmatprep.subr.bf16.mxu0 0
      %1267 = vmatpush1.bf16.msra.mxu0 0
      %1268 = vmatprep.subr.bf16.mxu0 0
      %1269 = vmatpush1.bf16.msra.mxu0 0
      %1270 = vmatprep.subr.bf16.mxu0 0
      %1271 = vmatpush1.bf16.msra.mxu0 0
      %1272 = vmatprep.subr.bf16.mxu0 0
      %1273 = vmatpush1.bf16.msra.mxu0 0
      %1274 = vmatprep.subr.bf16.mxu0 0
      %1275 = vmatpush1.bf16.msra.mxu0 %v1256
      %1276 = vmatprep.subr.bf16.mxu0 0
      %1277 = vmatpush1.bf16.msra.mxu0 %v1255
      %1278 = vmatprep.subr.bf16.mxu0 0
      %1279 = vmatpush2.bf16.msra.mxu0 0
      %1280 = vmatprep.subr.bf16.mxu0 0
      %1281 = vmatpush2.bf16.msra.mxu0 0
      %1282 = vmatprep.subr.bf16.mxu0 0
      %1283 = vmatpush2.bf16.msra.mxu0 0
      %1284 = vmatprep.subr.bf16.mxu0 0
      %1285 = vmatpush2.bf16.msra.mxu0 0
      %1286 = vmatprep.subr.bf16.mxu0 0
      %1287 = vmatpush2.bf16.msra.mxu0 0
      %1288 = vmatprep.subr.bf16.mxu0 0
      %1289 = vmatpush2.bf16.msra.mxu0 0
      %1290 = vmatprep.subr.bf16.mxu0 0
      %1291 = vmatpush2.bf16.msra.mxu0 0
      %1292 = vmatprep.subr.bf16.mxu0 0
      %1293 = vmatpush2.bf16.msra.mxu0 0
      %1294 = vmatprep.mubr.bf16.mxu0 0
      %1295 = vmatmul.mubr.bf16.gmra.mxu0 %v1260
      %v1296 = vpop.f32.mrf.mxu0
      %v1297 = vadd.f32 %v1245, %v1296
      %v1298 = vpop.f32.mrf.mxu0
      %v1299 = vpop.f32.mrf.mxu0
      %v1300 = vpop.f32.mrf.mxu0
      %1301 = vdwg.mxu0
      %v1302 = vpack.c.bf16 %v1297, %v1297
      %1304 = vrot.lane.b32.xlu0 %v1302, 96
      %v1305 = vpop.permute.xlu0 %1304
      %v1307 = vsel %vm504, %v1302, 0
      %v1310 = vsel %vm504, %v1305, 0
      %1312 = vmatprep.subr.bf16.mxu0 0
      %1313 = vmatpush1.bf16.xpose.msra.mxu0 0
      %1314 = vmatprep.subr.bf16.mxu0 0
      %1315 = vmatpush1.bf16.xpose.msra.mxu0 0
      %1316 = vmatprep.subr.bf16.mxu0 0
      %1317 = vmatpush1.bf16.xpose.msra.mxu0 0
      %1318 = vmatprep.subr.bf16.mxu0 0
      %1319 = vmatpush1.bf16.xpose.msra.mxu0 0
      %1320 = vmatprep.subr.bf16.mxu0 0
      %1321 = vmatpush1.bf16.xpose.msra.mxu0 0
      %1322 = vmatprep.subr.bf16.mxu0 0
      %1323 = vmatpush1.bf16.xpose.msra.mxu0 0
      %1324 = vmatprep.subr.bf16.mxu0 0
      %1325 = vmatpush1.bf16.xpose.msra.mxu0 0
      %1326 = vmatprep.subr.bf16.mxu0 0
      %1327 = vmatpush1.bf16.xpose.msra.mxu0 %v1310
      %1328 = vmatprep.subr.bf16.mxu0 0
      %1329 = vmatpush2.bf16.xpose.msra.mxu0 0
      %1330 = vmatprep.subr.bf16.mxu0 0
      %1331 = vmatpush2.bf16.xpose.msra.mxu0 0
      %1332 = vmatprep.subr.bf16.mxu0 0
      %1333 = vmatpush2.bf16.xpose.msra.mxu0 0
      %1334 = vmatprep.subr.bf16.mxu0 0
      %1335 = vmatpush2.bf16.xpose.msra.mxu0 0
      %1336 = vmatprep.subr.bf16.mxu0 0
      %1337 = vmatpush2.bf16.xpose.msra.mxu0 0
      %1338 = vmatprep.subr.bf16.mxu0 0
      %1339 = vmatpush2.bf16.xpose.msra.mxu0 0
      %1340 = vmatprep.subr.bf16.mxu0 0
      %1341 = vmatpush2.bf16.xpose.msra.mxu0 0
      %1342 = vmatprep.subr.bf16.mxu0 0
      %1343 = vmatpush2.bf16.xpose.msra.mxu0 0
      %1344 = vmatprep.mubr.bf16.mxu0 0
      %1345 = vmatmul.mubr.bf16.gmra.mxu0 %v1307
      %v1346 = vpop.f32.mrf.mxu0
      %v1347 = vadd.f32 %v499, %v1346
      %v1348 = vpop.f32.mrf.mxu0
      %v1349 = vpop.f32.mrf.mxu0
      %v1350 = vpop.f32.mrf.mxu0
      %1351 = vdwg.mxu0
      %v1352 = vsel %vm504, %v1347, -inf
      %1353 = vmax.xlane.f32.xlu0 %v1352
      %v1354 = vpop.xlane.xlu0 %1353
      %v1355 = vsub.f32 %v1347, %v1354
      %v1356 = vmul.f32 %v1355, 1.442695
      %v1357 = vpow.pop %v1356
      %v1358 = vsel %vm504, %v1357, 0.0
      %1359 = vadd.xlane.f32.xlu0 %v1358
      %v1360 = vpop.xlane.xlu0 %1359
      %v1361 = vrcp.pop %v1360
      %v1362 = vmul.f32 %v1357, %v1361
      %v1363 = vpack.c.bf16 %v1362, %v1362
      %1364 = vrot.lane.b32.xlu0 %v1302, 64
      %v1365 = vpop.permute.xlu0 %1364
      %v1367 = vsel %vm504, %v1363, 0
      %v1370 = vsel %vm568, %v1365, 0
      %1372 = vmatprep.subr.bf16.mxu0 0
      %1373 = vmatpush1.bf16.msra.mxu0 0
      %1374 = vmatprep.subr.bf16.mxu0 0
      %1375 = vmatpush1.bf16.msra.mxu0 0
      %1376 = vmatprep.subr.bf16.mxu0 0
      %1377 = vmatpush1.bf16.msra.mxu0 0
      %1378 = vmatprep.subr.bf16.mxu0 0
      %1379 = vmatpush1.bf16.msra.mxu0 0
      %1380 = vmatprep.subr.bf16.mxu0 0
      %1381 = vmatpush1.bf16.msra.mxu0 0
      %1382 = vmatprep.subr.bf16.mxu0 0
      %1383 = vmatpush1.bf16.msra.mxu0 0
      %1384 = vmatprep.subr.bf16.mxu0 0
      %1385 = vmatpush1.bf16.msra.mxu0 0
      %1386 = vmatprep.subr.bf16.mxu0 0
      %1387 = vmatpush1.bf16.msra.mxu0 %v1370
      %1388 = vmatprep.subr.bf16.mxu0 0
      %1389 = vmatpush2.bf16.msra.mxu0 0
      %1390 = vmatprep.subr.bf16.mxu0 0
      %1391 = vmatpush2.bf16.msra.mxu0 0
      %1392 = vmatprep.subr.bf16.mxu0 0
      %1393 = vmatpush2.bf16.msra.mxu0 0
      %1394 = vmatprep.subr.bf16.mxu0 0
      %1395 = vmatpush2.bf16.msra.mxu0 0
      %1396 = vmatprep.subr.bf16.mxu0 0
      %1397 = vmatpush2.bf16.msra.mxu0 0
      %1398 = vmatprep.subr.bf16.mxu0 0
      %1399 = vmatpush2.bf16.msra.mxu0 0
      %1400 = vmatprep.subr.bf16.mxu0 0
      %1401 = vmatpush2.bf16.msra.mxu0 0
      %1402 = vmatprep.subr.bf16.mxu0 0
      %1403 = vmatpush2.bf16.msra.mxu0 0
      %1404 = vmatprep.mubr.bf16.mxu0 0
      %1405 = vmatmul.mubr.bf16.gmra.mxu0 %v1367
      %v1406 = vpop.f32.mrf.mxu0
      %v1407 = vadd.f32 0.0, %v1406
      %v1408 = vpop.f32.mrf.mxu0
      %v1409 = vpop.f32.mrf.mxu0
      %v1410 = vpop.f32.mrf.mxu0
      %1411 = vdwg.mxu0
      %1412 = vrot.lane.b32.xlu0 %v1302, 120
      %v1413 = vpop.permute.xlu0 %1412
      %1414 = vrot.lane.b32.xlu0 %v1302, 88
      %v1415 = vpop.permute.xlu0 %1414
      %v1417 = vsel %vm504, %v1413, 0
      %v1420 = vsel %vm504, %v1415, 0
      %1422 = vmatprep.subr.bf16.mxu0 0
      %1423 = vmatpush1.bf16.xpose.msra.mxu0 0
      %1424 = vmatprep.subr.bf16.mxu0 0
      %1425 = vmatpush1.bf16.xpose.msra.mxu0 0
      %1426 = vmatprep.subr.bf16.mxu0 0
      %1427 = vmatpush1.bf16.xpose.msra.mxu0 0
      %1428 = vmatprep.subr.bf16.mxu0 0
      %1429 = vmatpush1.bf16.xpose.msra.mxu0 0
      %1430 = vmatprep.subr.bf16.mxu0 0
      %1431 = vmatpush1.bf16.xpose.msra.mxu0 0
      %1432 = vmatprep.subr.bf16.mxu0 0
      %1433 = vmatpush1.bf16.xpose.msra.mxu0 0
      %1434 = vmatprep.subr.bf16.mxu0 0
      %1435 = vmatpush1.bf16.xpose.msra.mxu0 0
      %1436 = vmatprep.subr.bf16.mxu0 0
      %1437 = vmatpush1.bf16.xpose.msra.mxu0 %v1420
      %1438 = vmatprep.subr.bf16.mxu0 0
      %1439 = vmatpush2.bf16.xpose.msra.mxu0 0
      %1440 = vmatprep.subr.bf16.mxu0 0
      %1441 = vmatpush2.bf16.xpose.msra.mxu0 0
      %1442 = vmatprep.subr.bf16.mxu0 0
      %1443 = vmatpush2.bf16.xpose.msra.mxu0 0
      %1444 = vmatprep.subr.bf16.mxu0 0
      %1445 = vmatpush2.bf16.xpose.msra.mxu0 0
      %1446 = vmatprep.subr.bf16.mxu0 0
      %1447 = vmatpush2.bf16.xpose.msra.mxu0 0
      %1448 = vmatprep.subr.bf16.mxu0 0
      %1449 = vmatpush2.bf16.xpose.msra.mxu0 0
      %1450 = vmatprep.subr.bf16.mxu0 0
      %1451 = vmatpush2.bf16.xpose.msra.mxu0 0
      %1452 = vmatprep.subr.bf16.mxu0 0
      %1453 = vmatpush2.bf16.xpose.msra.mxu0 0
      %1454 = vmatprep.mubr.bf16.mxu0 0
      %1455 = vmatmul.mubr.bf16.gmra.mxu0 %v1417
      %v1456 = vpop.f32.mrf.mxu0
      %v1457 = vadd.f32 %v499, %v1456
      %v1458 = vpop.f32.mrf.mxu0
      %v1459 = vpop.f32.mrf.mxu0
      %v1460 = vpop.f32.mrf.mxu0
      %1461 = vdwg.mxu0
      %v1462 = vsel %vm504, %v1457, -inf
      %1463 = vmax.xlane.f32.xlu0 %v1462
      %v1464 = vpop.xlane.xlu0 %1463
      %v1465 = vsub.f32 %v1457, %v1464
      %v1466 = vmul.f32 %v1465, 1.442695
      %v1467 = vpow.pop %v1466
      %v1468 = vsel %vm504, %v1467, 0.0
      %1469 = vadd.xlane.f32.xlu0 %v1468
      %v1470 = vpop.xlane.xlu0 %1469
      %v1471 = vrcp.pop %v1470
      %v1472 = vmul.f32 %v1467, %v1471
      %v1473 = vpack.c.bf16 %v1472, %v1472
      %1474 = vrot.lane.b32.xlu0 %v1302, 56
      %v1475 = vpop.permute.xlu0 %1474
      %v1477 = vsel %vm504, %v1473, 0
      %v1480 = vsel %vm568, %v1475, 0
      %1482 = vmatprep.subr.bf16.mxu0 0
      %1483 = vmatpush1.bf16.msra.mxu0 0
      %1484 = vmatprep.subr.bf16.mxu0 0
      %1485 = vmatpush1.bf16.msra.mxu0 0
      %1486 = vmatprep.subr.bf16.mxu0 0
      %1487 = vmatpush1.bf16.msra.mxu0 0
      %1488 = vmatprep.subr.bf16.mxu0 0
      %1489 = vmatpush1.bf16.msra.mxu0 0
      %1490 = vmatprep.subr.bf16.mxu0 0
      %1491 = vmatpush1.bf16.msra.mxu0 0
      %1492 = vmatprep.subr.bf16.mxu0 0
      %1493 = vmatpush1.bf16.msra.mxu0 0
      %1494 = vmatprep.subr.bf16.mxu0 0
      %1495 = vmatpush1.bf16.msra.mxu0 0
      %1496 = vmatprep.subr.bf16.mxu0 0
      %1497 = vmatpush1.bf16.msra.mxu0 %v1480
      %1498 = vmatprep.subr.bf16.mxu0 0
      %1499 = vmatpush2.bf16.msra.mxu0 0
      %1500 = vmatprep.subr.bf16.mxu0 0
      %1501 = vmatpush2.bf16.msra.mxu0 0
      %1502 = vmatprep.subr.bf16.mxu0 0
      %1503 = vmatpush2.bf16.msra.mxu0 0
      %1504 = vmatprep.subr.bf16.mxu0 0
      %1505 = vmatpush2.bf16.msra.mxu0 0
      %1506 = vmatprep.subr.bf16.mxu0 0
      %1507 = vmatpush2.bf16.msra.mxu0 0
      %1508 = vmatprep.subr.bf16.mxu0 0
      %1509 = vmatpush2.bf16.msra.mxu0 0
      %1510 = vmatprep.subr.bf16.mxu0 0
      %1511 = vmatpush2.bf16.msra.mxu0 0
      %1512 = vmatprep.subr.bf16.mxu0 0
      %1513 = vmatpush2.bf16.msra.mxu0 0
      %1514 = vmatprep.mubr.bf16.mxu0 0
      %1515 = vmatmul.mubr.bf16.gmra.mxu0 %v1477
      %v1516 = vpop.f32.mrf.mxu0
      %v1517 = vadd.f32 0.0, %v1516
      %v1518 = vpop.f32.mrf.mxu0
      %v1519 = vpop.f32.mrf.mxu0
      %v1520 = vpop.f32.mrf.mxu0
      %1521 = vdwg.mxu0
      %1522 = vrot.lane.b32.xlu0 %v1302, 112
      %v1523 = vpop.permute.xlu0 %1522
      %1524 = vrot.lane.b32.xlu0 %v1302, 80
      %v1525 = vpop.permute.xlu0 %1524
      %v1527 = vsel %vm504, %v1523, 0
      %v1530 = vsel %vm504, %v1525, 0
      %1532 = vmatprep.subr.bf16.mxu0 0
      %1533 = vmatpush1.bf16.xpose.msra.mxu0 0
      %1534 = vmatprep.subr.bf16.mxu0 0
      %1535 = vmatpush1.bf16.xpose.msra.mxu0 0
      %1536 = vmatprep.subr.bf16.mxu0 0
      %1537 = vmatpush1.bf16.xpose.msra.mxu0 0
      %1538 = vmatprep.subr.bf16.mxu0 0
      %1539 = vmatpush1.bf16.xpose.msra.mxu0 0
      %1540 = vmatprep.subr.bf16.mxu0 0
      %1541 = vmatpush1.bf16.xpose.msra.mxu0 0
      %1542 = vmatprep.subr.bf16.mxu0 0
      %1543 = vmatpush1.bf16.xpose.msra.mxu0 0
      %1544 = vmatprep.subr.bf16.mxu0 0
      %1545 = vmatpush1.bf16.xpose.msra.mxu0 0
      %1546 = vmatprep.subr.bf16.mxu0 0
      %1547 = vmatpush1.bf16.xpose.msra.mxu0 %v1530
      %1548 = vmatprep.subr.bf16.mxu0 0
      %1549 = vmatpush2.bf16.xpose.msra.mxu0 0
      %1550 = vmatprep.subr.bf16.mxu0 0
      %1551 = vmatpush2.bf16.xpose.msra.mxu0 0
      %1552 = vmatprep.subr.bf16.mxu0 0
      %1553 = vmatpush2.bf16.xpose.msra.mxu0 0
      %1554 = vmatprep.subr.bf16.mxu0 0
      %1555 = vmatpush2.bf16.xpose.msra.mxu0 0
      %1556 = vmatprep.subr.bf16.mxu0 0
      %1557 = vmatpush2.bf16.xpose.msra.mxu0 0
      %1558 = vmatprep.subr.bf16.mxu0 0
      %1559 = vmatpush2.bf16.xpose.msra.mxu0 0
      %1560 = vmatprep.subr.bf16.mxu0 0
      %1561 = vmatpush2.bf16.xpose.msra.mxu0 0
      %1562 = vmatprep.subr.bf16.mxu0 0
      %1563 = vmatpush2.bf16.xpose.msra.mxu0 0
      %1564 = vmatprep.mubr.bf16.mxu0 0
      %1565 = vmatmul.mubr.bf16.gmra.mxu0 %v1527
      %v1566 = vpop.f32.mrf.mxu0
      %v1567 = vadd.f32 %v499, %v1566
      %v1568 = vpop.f32.mrf.mxu0
      %v1569 = vpop.f32.mrf.mxu0
      %v1570 = vpop.f32.mrf.mxu0
      %1571 = vdwg.mxu0
      %v1572 = vsel %vm504, %v1567, -inf
      %1573 = vmax.xlane.f32.xlu0 %v1572
      %v1574 = vpop.xlane.xlu0 %1573
      %v1575 = vsub.f32 %v1567, %v1574
      %v1576 = vmul.f32 %v1575, 1.442695
      %v1577 = vpow.pop %v1576
      %v1578 = vsel %vm504, %v1577, 0.0
      %1579 = vadd.xlane.f32.xlu0 %v1578
      %v1580 = vpop.xlane.xlu0 %1579
      %v1581 = vrcp.pop %v1580
      %v1582 = vmul.f32 %v1577, %v1581
      %v1583 = vpack.c.bf16 %v1582, %v1582
      %1584 = vrot.lane.b32.xlu0 %v1302, 48
      %v1585 = vpop.permute.xlu0 %1584
      %v1587 = vsel %vm504, %v1583, 0
      %v1590 = vsel %vm568, %v1585, 0
      %1592 = vmatprep.subr.bf16.mxu0 0
      %1593 = vmatpush1.bf16.msra.mxu0 0
      %1594 = vmatprep.subr.bf16.mxu0 0
      %1595 = vmatpush1.bf16.msra.mxu0 0
      %1596 = vmatprep.subr.bf16.mxu0 0
      %1597 = vmatpush1.bf16.msra.mxu0 0
      %1598 = vmatprep.subr.bf16.mxu0 0
      %1599 = vmatpush1.bf16.msra.mxu0 0
      %1600 = vmatprep.subr.bf16.mxu0 0
      %1601 = vmatpush1.bf16.msra.mxu0 0
      %1602 = vmatprep.subr.bf16.mxu0 0
      %1603 = vmatpush1.bf16.msra.mxu0 0
      %1604 = vmatprep.subr.bf16.mxu0 0
      %1605 = vmatpush1.bf16.msra.mxu0 0
      %1606 = vmatprep.subr.bf16.mxu0 0
      %1607 = vmatpush1.bf16.msra.mxu0 %v1590
      %1608 = vmatprep.subr.bf16.mxu0 0
      %1609 = vmatpush2.bf16.msra.mxu0 0
      %1610 = vmatprep.subr.bf16.mxu0 0
      %1611 = vmatpush2.bf16.msra.mxu0 0
      %1612 = vmatprep.subr.bf16.mxu0 0
      %1613 = vmatpush2.bf16.msra.mxu0 0
      %1614 = vmatprep.subr.bf16.mxu0 0
      %1615 = vmatpush2.bf16.msra.mxu0 0
      %1616 = vmatprep.subr.bf16.mxu0 0
      %1617 = vmatpush2.bf16.msra.mxu0 0
      %1618 = vmatprep.subr.bf16.mxu0 0
      %1619 = vmatpush2.bf16.msra.mxu0 0
      %1620 = vmatprep.subr.bf16.mxu0 0
      %1621 = vmatpush2.bf16.msra.mxu0 0
      %1622 = vmatprep.subr.bf16.mxu0 0
      %1623 = vmatpush2.bf16.msra.mxu0 0
      %1624 = vmatprep.mubr.bf16.mxu0 0
      %1625 = vmatmul.mubr.bf16.gmra.mxu0 %v1587
      %v1626 = vpop.f32.mrf.mxu0
      %v1627 = vadd.f32 0.0, %v1626
      %v1628 = vpop.f32.mrf.mxu0
      %v1629 = vpop.f32.mrf.mxu0
      %v1630 = vpop.f32.mrf.mxu0
      %1631 = vdwg.mxu0
      %1632 = vrot.lane.b32.xlu0 %v1302, 104
      %v1633 = vpop.permute.xlu0 %1632
      %1634 = vrot.lane.b32.xlu0 %v1302, 72
      %v1635 = vpop.permute.xlu0 %1634
      %v1637 = vsel %vm504, %v1633, 0
      %v1640 = vsel %vm504, %v1635, 0
      %1642 = vmatprep.subr.bf16.mxu0 0
      %1643 = vmatpush1.bf16.xpose.msra.mxu0 0
      %1644 = vmatprep.subr.bf16.mxu0 0
      %1645 = vmatpush1.bf16.xpose.msra.mxu0 0
      %1646 = vmatprep.subr.bf16.mxu0 0
      %1647 = vmatpush1.bf16.xpose.msra.mxu0 0
      %1648 = vmatprep.subr.bf16.mxu0 0
      %1649 = vmatpush1.bf16.xpose.msra.mxu0 0
      %1650 = vmatprep.subr.bf16.mxu0 0
      %1651 = vmatpush1.bf16.xpose.msra.mxu0 0
      %1652 = vmatprep.subr.bf16.mxu0 0
      %1653 = vmatpush1.bf16.xpose.msra.mxu0 0
      %1654 = vmatprep.subr.bf16.mxu0 0
      %1655 = vmatpush1.bf16.xpose.msra.mxu0 0
      %1656 = vmatprep.subr.bf16.mxu0 0
      %1657 = vmatpush1.bf16.xpose.msra.mxu0 %v1640
      %1658 = vmatprep.subr.bf16.mxu0 0
      %1659 = vmatpush2.bf16.xpose.msra.mxu0 0
      %1660 = vmatprep.subr.bf16.mxu0 0
      %1661 = vmatpush2.bf16.xpose.msra.mxu0 0
      %1662 = vmatprep.subr.bf16.mxu0 0
      %1663 = vmatpush2.bf16.xpose.msra.mxu0 0
      %1664 = vmatprep.subr.bf16.mxu0 0
      %1665 = vmatpush2.bf16.xpose.msra.mxu0 0
      %1666 = vmatprep.subr.bf16.mxu0 0
      %1667 = vmatpush2.bf16.xpose.msra.mxu0 0
      %1668 = vmatprep.subr.bf16.mxu0 0
      %1669 = vmatpush2.bf16.xpose.msra.mxu0 0
      %1670 = vmatprep.subr.bf16.mxu0 0
      %1671 = vmatpush2.bf16.xpose.msra.mxu0 0
      %1672 = vmatprep.subr.bf16.mxu0 0
      %1673 = vmatpush2.bf16.xpose.msra.mxu0 0
      %1674 = vmatprep.mubr.bf16.mxu0 0
      %1675 = vmatmul.mubr.bf16.gmra.mxu0 %v1637
      %v1676 = vpop.f32.mrf.mxu0
      %v1677 = vadd.f32 %v499, %v1676
      %v1678 = vpop.f32.mrf.mxu0
      %v1679 = vpop.f32.mrf.mxu0
      %v1680 = vpop.f32.mrf.mxu0
      %1681 = vdwg.mxu0
      %v1682 = vsel %vm504, %v1677, -inf
      %1683 = vmax.xlane.f32.xlu0 %v1682
      %v1684 = vpop.xlane.xlu0 %1683
      %v1685 = vsub.f32 %v1677, %v1684
      %v1686 = vmul.f32 %v1685, 1.442695
      %v1687 = vpow.pop %v1686
      %v1688 = vsel %vm504, %v1687, 0.0
      %1689 = vadd.xlane.f32.xlu0 %v1688
      %v1690 = vpop.xlane.xlu0 %1689
      %v1691 = vrcp.pop %v1690
      %v1692 = vmul.f32 %v1687, %v1691
      %v1693 = vpack.c.bf16 %v1692, %v1692
      %1694 = vrot.lane.b32.xlu0 %v1302, 40
      %v1695 = vpop.permute.xlu0 %1694
      %v1697 = vsel %vm504, %v1693, 0
      %v1700 = vsel %vm568, %v1695, 0
      %1702 = vmatprep.subr.bf16.mxu0 0
      %1703 = vmatpush1.bf16.msra.mxu0 0
      %1704 = vmatprep.subr.bf16.mxu0 0
      %1705 = vmatpush1.bf16.msra.mxu0 0
      %1706 = vmatprep.subr.bf16.mxu0 0
      %1707 = vmatpush1.bf16.msra.mxu0 0
      %1708 = vmatprep.subr.bf16.mxu0 0
      %1709 = vmatpush1.bf16.msra.mxu0 0
      %1710 = vmatprep.subr.bf16.mxu0 0
      %1711 = vmatpush1.bf16.msra.mxu0 0
      %1712 = vmatprep.subr.bf16.mxu0 0
      %1713 = vmatpush1.bf16.msra.mxu0 0
      %1714 = vmatprep.subr.bf16.mxu0 0
      %1715 = vmatpush1.bf16.msra.mxu0 0
      %1716 = vmatprep.subr.bf16.mxu0 0
      %1717 = vmatpush1.bf16.msra.mxu0 %v1700
      %1718 = vmatprep.subr.bf16.mxu0 0
      %1719 = vmatpush2.bf16.msra.mxu0 0
      %1720 = vmatprep.subr.bf16.mxu0 0
      %1721 = vmatpush2.bf16.msra.mxu0 0
      %1722 = vmatprep.subr.bf16.mxu0 0
      %1723 = vmatpush2.bf16.msra.mxu0 0
      %1724 = vmatprep.subr.bf16.mxu0 0
      %1725 = vmatpush2.bf16.msra.mxu0 0
      %1726 = vmatprep.subr.bf16.mxu0 0
      %1727 = vmatpush2.bf16.msra.mxu0 0
      %1728 = vmatprep.subr.bf16.mxu0 0
      %1729 = vmatpush2.bf16.msra.mxu0 0
      %1730 = vmatprep.subr.bf16.mxu0 0
      %1731 = vmatpush2.bf16.msra.mxu0 0
      %1732 = vmatprep.subr.bf16.mxu0 0
      %1733 = vmatpush2.bf16.msra.mxu0 0
      %1734 = vmatprep.mubr.bf16.mxu0 0
      %1735 = vmatmul.mubr.bf16.gmra.mxu0 %v1697
      %v1736 = vpop.f32.mrf.mxu0
      %v1737 = vadd.f32 0.0, %v1736
      %v1738 = vpop.f32.mrf.mxu0
      %v1739 = vpop.f32.mrf.mxu0
      %v1740 = vpop.f32.mrf.mxu0
      %1741 = vdwg.mxu0
      %1743 = vrot.lane.b32.xlu0 %v1517, 8
      %v1744 = vpop.permute.xlu0 %1743
      %1747 = vrot.lane.b32.xlu0 %v1627, 16
      %v1748 = vpop.permute.xlu0 %1747
      %1751 = vrot.lane.b32.xlu0 %v1737, 24
      %v1752 = vpop.permute.xlu0 %1751
      %v1754 = vsel %vm504, %v1407, %v1744
      %v1755 = vsel %vm955, %v1754, %v1748
      %v1756 = vsel %vm957, %v1755, %v1752
      %v1757 = vpack.c.bf16 %v1756, %v1756
      %v1758 = vld [vmem:[%s3] sm:$0xf]
      %v1759 = vld [vmem:[%s3 + $0x4] sm:$0xf]
      %v1760 = vld [vmem:[%s3 + $0x8] sm:$0xf]
      %v1761 = vld [vmem:[%s3 + $0xc] sm:$0xf]
      %v1762 = vld [vmem:[%s7] sm:$0x1]
      %v1763 = vlaneseq
      %v1764 = vshrl.u32 %v1763, 7
      %v1765 = vsub.s32 0, %v1764
      %v1766 = vrot.slane %v1762, %v1765
      %v1771 = vunpack.c.l.b16 %v1758
      %v1772 = vunpack.c.l.b16 %v1759
      %v1773 = vunpack.c.l.b16 %v1760
      %v1774 = vunpack.c.l.b16 %v1761
      %v1775 = vpack.c.b16 %v1772, %v1771
      %v1776 = vpack.c.b16 %v1774, %v1773
      %v1780 = vsel %vm450, %v1757, 0
      %1782 = vmatprep.subr.bf16.mxu0 0
      %1783 = vmatpush1.bf16.msra.mxu0 0
      %1784 = vmatprep.subr.bf16.mxu0 0
      %1785 = vmatpush1.bf16.msra.mxu0 0
      %1786 = vmatprep.subr.bf16.mxu0 0
      %1787 = vmatpush1.bf16.msra.mxu0 0
      %1788 = vmatprep.subr.bf16.mxu0 0
      %1789 = vmatpush1.bf16.msra.mxu0 0
      %1790 = vmatprep.subr.bf16.mxu0 0
      %1791 = vmatpush1.bf16.msra.mxu0 0
      %1792 = vmatprep.subr.bf16.mxu0 0
      %1793 = vmatpush1.bf16.msra.mxu0 0
      %1794 = vmatprep.subr.bf16.mxu0 0
      %1795 = vmatpush1.bf16.msra.mxu0 %v1776
      %1796 = vmatprep.subr.bf16.mxu0 0
      %1797 = vmatpush1.bf16.msra.mxu0 %v1775
      %1798 = vmatprep.subr.bf16.mxu0 0
      %1799 = vmatpush2.bf16.msra.mxu0 0
      %1800 = vmatprep.subr.bf16.mxu0 0
      %1801 = vmatpush2.bf16.msra.mxu0 0
      %1802 = vmatprep.subr.bf16.mxu0 0
      %1803 = vmatpush2.bf16.msra.mxu0 0
      %1804 = vmatprep.subr.bf16.mxu0 0
      %1805 = vmatpush2.bf16.msra.mxu0 0
      %1806 = vmatprep.subr.bf16.mxu0 0
      %1807 = vmatpush2.bf16.msra.mxu0 0
      %1808 = vmatprep.subr.bf16.mxu0 0
      %1809 = vmatpush2.bf16.msra.mxu0 0
      %1810 = vmatprep.subr.bf16.mxu0 0
      %1811 = vmatpush2.bf16.msra.mxu0 0
      %1812 = vmatprep.subr.bf16.mxu0 0
      %1813 = vmatpush2.bf16.msra.mxu0 0
      %1814 = vmatprep.mubr.bf16.mxu0 0
      %1815 = vmatmul.mubr.bf16.gmra.mxu0 %v1780
      %v1816 = vpop.f32.mrf.mxu0
      %v1817 = vadd.f32 %v1766, %v1816
      %v1818 = vpop.f32.mrf.mxu0
      %v1819 = vpop.f32.mrf.mxu0
      %v1820 = vpop.f32.mrf.mxu0
      %1821 = vdwg.mxu0
      %v1822 = vadd.f32 %v1234, %v1817
      %v1823 = vld [vmem:[%s7 + $0x2] sm:$0x1]
      %v1824 = vld [vmem:[%s7 + $0x3] sm:$0x1]
      %v1825 = vsel %vm450, %v1822, 0.0
      %1826 = vadd.xlane.f32.xlu0 %v1825
      %v1827 = vpop.xlane.xlu0 %1826
      %v1828 = vmul.f32 %v1827, %v1030
      %v1829 = vsub.f32 %v1822, %v1828
      %v1830 = vmul.f32 %v1829, %v1829
      %v1831 = vsel %vm450, %v1830, 0.0
      %1832 = vadd.xlane.f32.xlu0 %v1831
      %v1833 = vpop.xlane.xlu0 %1832
      %v1834 = vmul.f32 %v1833, %v1030
      %v1835 = vadd.f32 %v1834, 1e-12
      %v1836 = vrsqrt.pop %v1835
      %v1837 = vmul.f32 %v1829, %v1836
      %v1838 = vlaneseq
      %v1839 = vshrl.u32 %v1838, 7
      %v1840 = vsub.s32 0, %v1839
      %v1841 = vrot.slane %v1823, %v1840
      %v1842 = vmul.f32 %v1837, %v1841
      %v1843 = vlaneseq
      %v1844 = vshrl.u32 %v1843, 7
      %v1845 = vsub.s32 0, %v1844
      %v1846 = vrot.slane %v1824, %v1845
      %v1847 = vadd.f32 %v1842, %v1846
      %v1848 = vpack.c.bf16 %v1847, %v1847
      %v1849 = vld [vmem:[%s4] sm:$0xf]
      %v1850 = vld [vmem:[%s4 + $0x4] sm:$0xf]
      %v1851 = vld [vmem:[%s4 + $0x8] sm:$0xf]
      %v1852 = vld [vmem:[%s4 + $0xc] sm:$0xf]
      %v1853 = vld [vmem:[%s8] sm:$0x1]
      %v1855 = vlaneseq
      %v1856 = vshrl.u32 %v1855, 7
      %v1857 = vsub.s32 0, %v1856
      %v1858 = vrot.slane %v1853, %v1857
      %v1864 = vunpack.c.l.b16 %v1849
      %v1865 = vunpack.c.l.b16 %v1850
      %v1866 = vunpack.c.l.b16 %v1851
      %v1867 = vunpack.c.l.b16 %v1852
      %v1868 = vpack.c.b16 %v1865, %v1864
      %v1869 = vpack.c.b16 %v1867, %v1866
      %v1873 = vsel %vm450, %v1848, 0
      %1875 = vmatprep.subr.bf16.mxu0 0
      %1876 = vmatpush1.bf16.msra.mxu0 0
      %1877 = vmatprep.subr.bf16.mxu0 0
      %1878 = vmatpush1.bf16.msra.mxu0 0
      %1879 = vmatprep.subr.bf16.mxu0 0
      %1880 = vmatpush1.bf16.msra.mxu0 0
      %1881 = vmatprep.subr.bf16.mxu0 0
      %1882 = vmatpush1.bf16.msra.mxu0 0
      %1883 = vmatprep.subr.bf16.mxu0 0
      %1884 = vmatpush1.bf16.msra.mxu0 0
      %1885 = vmatprep.subr.bf16.mxu0 0
      %1886 = vmatpush1.bf16.msra.mxu0 0
      %1887 = vmatprep.subr.bf16.mxu0 0
      %1888 = vmatpush1.bf16.msra.mxu0 %v1869
      %1889 = vmatprep.subr.bf16.mxu0 0
      %1890 = vmatpush1.bf16.msra.mxu0 %v1868
      %1891 = vmatprep.subr.bf16.mxu0 0
      %1892 = vmatpush2.bf16.msra.mxu0 0
      %1893 = vmatprep.subr.bf16.mxu0 0
      %1894 = vmatpush2.bf16.msra.mxu0 0
      %1895 = vmatprep.subr.bf16.mxu0 0
      %1896 = vmatpush2.bf16.msra.mxu0 0
      %1897 = vmatprep.subr.bf16.mxu0 0
      %1898 = vmatpush2.bf16.msra.mxu0 0
      %1899 = vmatprep.subr.bf16.mxu0 0
      %1900 = vmatpush2.bf16.msra.mxu0 0
      %1901 = vmatprep.subr.bf16.mxu0 0
      %1902 = vmatpush2.bf16.msra.mxu0 0
      %1903 = vmatprep.subr.bf16.mxu0 0
      %1904 = vmatpush2.bf16.msra.mxu0 0
      %1905 = vmatprep.subr.bf16.mxu0 0
      %1906 = vmatpush2.bf16.msra.mxu0 0
      %1907 = vmatprep.mubr.bf16.mxu0 0
      %1908 = vmatmul.mubr.bf16.gmra.mxu0 %v1873
      %v1909 = vpop.f32.mrf.mxu0
      %v1910 = vadd.f32 %v1858, %v1909
      %v1911 = vpop.f32.mrf.mxu0
      %v1912 = vpop.f32.mrf.mxu0
      %v1913 = vpop.f32.mrf.mxu0
      %1914 = vdwg.mxu0
      %v1915 = vmul.f32 %v1910, %v1910
      %v1916 = vmul.f32 %v1910, %v1915
      %v1917 = vmul.f32 %v1916, 0.044715
      %v1918 = vadd.f32 %v1910, %v1917
      %v1919 = vmul.f32 %v1918, 0.7978846
      %v1920 = vtanh.pop %v1919
      %v1921 = vadd.f32 %v1920, 1.0
      %v1922 = vmul.f32 %v1921, 0.5
      %v1923 = vmul.f32 %v1910, %v1922
      %v1924 = vpack.c.bf16 %v1923, %v1923
      %v1925 = vld [vmem:[%s5] sm:$0xf]
      %v1926 = vld [vmem:[%s5 + $0x4] sm:$0xf]
      %v1927 = vld [vmem:[%s5 + $0x8] sm:$0xf]
      %v1928 = vld [vmem:[%s5 + $0xc] sm:$0xf]
      %v1929 = vld [vmem:[%s5 + $0x10] sm:$0xf]
      %v1930 = vld [vmem:[%s5 + $0x14] sm:$0xf]
      %v1931 = vld [vmem:[%s5 + $0x18] sm:$0xf]
      %v1932 = vld [vmem:[%s5 + $0x1c] sm:$0xf]
      %v1933 = vld [vmem:[%s7 + $0x1] sm:$0x1]
      %v1934 = vlaneseq
      %v1935 = vshrl.u32 %v1934, 7
      %v1936 = vsub.s32 0, %v1935
      %v1937 = vrot.slane %v1933, %v1936
      %v1946 = vunpack.c.l.b16 %v1925
      %v1947 = vunpack.c.l.b16 %v1926
      %v1948 = vunpack.c.l.b16 %v1927
      %v1949 = vunpack.c.l.b16 %v1928
      %v1950 = vunpack.c.l.b16 %v1929
      %v1951 = vunpack.c.l.b16 %v1930
      %v1952 = vunpack.c.l.b16 %v1931
      %v1953 = vunpack.c.l.b16 %v1932
      %v1954 = vpack.c.b16 %v1947, %v1946
      %v1955 = vpack.c.b16 %v1949, %v1948
      %v1956 = vpack.c.b16 %v1951, %v1950
      %v1957 = vpack.c.b16 %v1953, %v1952
      %v1963 = vsel %vm1165, %v1924, 0
      %1965 = vmatprep.subr.bf16.mxu0 0
      %1966 = vmatpush1.bf16.msra.mxu0 0
      %1967 = vmatprep.subr.bf16.mxu0 0
      %1968 = vmatpush1.bf16.msra.mxu0 0
      %1969 = vmatprep.subr.bf16.mxu0 0
      %1970 = vmatpush1.bf16.msra.mxu0 0
      %1971 = vmatprep.subr.bf16.mxu0 0
      %1972 = vmatpush1.bf16.msra.mxu0 0
      %1973 = vmatprep.subr.bf16.mxu0 0
      %1974 = vmatpush1.bf16.msra.mxu0 %v1957
      %1975 = vmatprep.subr.bf16.mxu0 0
      %1976 = vmatpush1.bf16.msra.mxu0 %v1956
      %1977 = vmatprep.subr.bf16.mxu0 0
      %1978 = vmatpush1.bf16.msra.mxu0 %v1955
      %1979 = vmatprep.subr.bf16.mxu0 0
      %1980 = vmatpush1.bf16.msra.mxu0 %v1954
      %1981 = vmatprep.subr.bf16.mxu0 0
      %1982 = vmatpush2.bf16.msra.mxu0 0
      %1983 = vmatprep.subr.bf16.mxu0 0
      %1984 = vmatpush2.bf16.msra.mxu0 0
      %1985 = vmatprep.subr.bf16.mxu0 0
      %1986 = vmatpush2.bf16.msra.mxu0 0
      %1987 = vmatprep.subr.bf16.mxu0 0
      %1988 = vmatpush2.bf16.msra.mxu0 0
      %1989 = vmatprep.subr.bf16.mxu0 0
      %1990 = vmatpush2.bf16.msra.mxu0 0
      %1991 = vmatprep.subr.bf16.mxu0 0
      %1992 = vmatpush2.bf16.msra.mxu0 0
      %1993 = vmatprep.subr.bf16.mxu0 0
      %1994 = vmatpush2.bf16.msra.mxu0 0
      %1995 = vmatprep.subr.bf16.mxu0 0
      %1996 = vmatpush2.bf16.msra.mxu0 0
      %1997 = vmatprep.mubr.bf16.mxu0 0
      %1998 = vmatmul.mubr.bf16.gmra.mxu0 %v1963
      %v1999 = vpop.f32.mrf.mxu0
      %v2000 = vadd.f32 %v1937, %v1999
      %v2001 = vpop.f32.mrf.mxu0
      %v2002 = vpop.f32.mrf.mxu0
      %v2003 = vpop.f32.mrf.mxu0
      %2004 = vdwg.mxu0
      %v2005 = vadd.f32 %v1847, %v2000
      %v2006 = vld [vmem:[%s7 + $0x4] sm:$0x1]
      %v2007 = vld [vmem:[%s7 + $0x5] sm:$0x1]
      %v2008 = vsel %vm450, %v2005, 0.0
      %2009 = vadd.xlane.f32.xlu0 %v2008
      %v2010 = vpop.xlane.xlu0 %2009
      %v2011 = vmul.f32 %v2010, %v1030
      %v2012 = vsub.f32 %v2005, %v2011
      %v2013 = vmul.f32 %v2012, %v2012
      %v2014 = vsel %vm450, %v2013, 0.0
      %2015 = vadd.xlane.f32.xlu0 %v2014
      %v2016 = vpop.xlane.xlu0 %2015
      %v2017 = vmul.f32 %v2016, %v1030
      %v2018 = vadd.f32 %v2017, 1e-12
      %v2019 = vrsqrt.pop %v2018
      %v2020 = vmul.f32 %v2012, %v2019
      %v2021 = vlaneseq
      %v2022 = vshrl.u32 %v2021, 7
      %v2023 = vsub.s32 0, %v2022
      %v2024 = vrot.slane %v2006, %v2023
      %v2025 = vmul.f32 %v2020, %v2024
      %v2026 = vlaneseq
      %v2027 = vshrl.u32 %v2026, 7
      %v2028 = vsub.s32 0, %v2027
      %v2029 = vrot.slane %v2007, %v2028
      %v2030 = vadd.f32 %v2025, %v2029
      %v2031 = vpack.c.bf16 %v2030, %v2030
      %v2032 = vld [vmem:[%s9] sm:$0xf]
      %v2033 = vld [vmem:[%s9 + $0x4] sm:$0xf]
      %v2034 = vld [vmem:[%s9 + $0x8] sm:$0xf]
      %v2035 = vld [vmem:[%s9 + $0xc] sm:$0xf]
      %v2036 = vld [vmem:[%s7 + $0x6] sm:$0x1]
      %v2041 = vunpack.c.l.b16 %v2032
      %v2042 = vunpack.c.l.b16 %v2033
      %v2043 = vunpack.c.l.b16 %v2034
      %v2044 = vunpack.c.l.b16 %v2035
      %v2045 = vpack.c.b16 %v2042, %v2041
      %v2046 = vpack.c.b16 %v2044, %v2043
      %v2050 = vsel %vm450, %v2031, 0
      %2052 = vmatprep.subr.bf16.mxu0 0
      %2053 = vmatpush1.bf16.msra.mxu0 0
      %2054 = vmatprep.subr.bf16.mxu0 0
      %2055 = vmatpush1.bf16.msra.mxu0 0
      %2056 = vmatprep.subr.bf16.mxu0 0
      %2057 = vmatpush1.bf16.msra.mxu0 0
      %2058 = vmatprep.subr.bf16.mxu0 0
      %2059 = vmatpush1.bf16.msra.mxu0 0
      %2060 = vmatprep.subr.bf16.mxu0 0
      %2061 = vmatpush1.bf16.msra.mxu0 0
      %2062 = vmatprep.subr.bf16.mxu0 0
      %2063 = vmatpush1.bf16.msra.mxu0 0
      %2064 = vmatprep.subr.bf16.mxu0 0
      %2065 = vmatpush1.bf16.msra.mxu0 %v2046
      %2066 = vmatprep.subr.bf16.mxu0 0
      %2067 = vmatpush1.bf16.msra.mxu0 %v2045
      %2068 = vmatprep.subr.bf16.mxu0 0
      %2069 = vmatpush2.bf16.msra.mxu0 0
      %2070 = vmatprep.subr.bf16.mxu0 0
      %2071 = vmatpush2.bf16.msra.mxu0 0
      %2072 = vmatprep.subr.bf16.mxu0 0
      %2073 = vmatpush2.bf16.msra.mxu0 0
      %2074 = vmatprep.subr.bf16.mxu0 0
      %2075 = vmatpush2.bf16.msra.mxu0 0
      %2076 = vmatprep.subr.bf16.mxu0 0
      %2077 = vmatpush2.bf16.msra.mxu0 0
      %2078 = vmatprep.subr.bf16.mxu0 0
      %2079 = vmatpush2.bf16.msra.mxu0 0
      %2080 = vmatprep.subr.bf16.mxu0 0
      %2081 = vmatpush2.bf16.msra.mxu0 0
      %2082 = vmatprep.subr.bf16.mxu0 0
      %2083 = vmatpush2.bf16.msra.mxu0 0
      %2084 = vmatprep.mubr.bf16.mxu0 0
      %2085 = vmatmul.mubr.bf16.gmra.mxu0 %v2050
      %v2086 = vpop.f32.mrf.mxu0
      %v2087 = vadd.f32 %v2036, %v2086
      %v2088 = vpop.f32.mrf.mxu0
      %v2089 = vpop.f32.mrf.mxu0
      %v2090 = vpop.f32.mrf.mxu0
      %2091 = vdwg.mxu0
      %v2092 = vtanh.pop %v2087
      %v2093 = vld [vmem:[%s10] sm:$0x1]
      %v2094 = vmul.f32 %v2092, %v2093
      %vm2095 = vcmask 253952
      %v2096 = vsel %vm2095, %v2094, 0.0
      %2097 = vadd.xlane.f32.xlu0 %v2096
      %v2098 = vpop.xlane.xlu0 %2097
      %v2099 = vld [vmem:[#allocation2] sm:$0x1]
      %v2100 = vadd.f32 %v2098, %v2099
      %vm2101 = vcmask 0
      %2102 = vst.msk [vmem:[%s422] sm:$0x1] %vm2101, %v2100
      %p2103 = scmp.lt.s32.totalorder %s25, 1
      %s2104 = scalar_select %p2103, %s25, 1
      %s2105 = scalar_lea.vmem %s12, %s2104
      // Predicated region
      $region69: #{sentence_pair_classifier_forward.1} parent=67 // pred_check
        %p2106 = pneg %p305
      $region70: #{sentence_pair_classifier_forward.1} parent=67 // pred_check_branch
        %2108 = sbr.rel (%p2106) target = $region72
      $region71: #{sentence_pair_classifier_forward.1} parent=67 // pred_region
        _
      $region72: #{sentence_pair_classifier_forward.1} parent=67 // pred_fallthru
        _
    $region68: #{sentence_pair_classifier_forward.1} parent=5 // pred_fallthru
      _
    %p2109 = scmp.le.s32.totalorder 2, %s20
    // Predicated region
    $region73: #{sentence_pair_classifier_forward.1} parent=5 // pred_check
      %p2110 = pneg %p2109
    $region74: #{sentence_pair_classifier_forward.1} parent=5 // pred_check_branch
      %2112 = sbr.rel (%p2110) target = $region76
    $region75: #{sentence_pair_classifier_forward.1} parent=5 // pred_region
      %s2113 = ssub.s32 %s20, 2
      // Predicated region
      $region77: #{sentence_pair_classifier_forward.1} parent=75 // pred_check
        %p2114 = pneg %p311
      $region78: #{sentence_pair_classifier_forward.1} parent=75 // pred_check_branch
        %2116 = sbr.rel (%p2114) target = $region80
      $region79: #{sentence_pair_classifier_forward.1} parent=75 // pred_region
        %p2117 = scmp.lt.s32.totalorder %s26, 1
        %s2118 = scalar_select %p2117, %s26, 1
        %s2119 = scalar_lea.vmem %s12, %s2118
      $region80: #{sentence_pair_classifier_forward.1} parent=75 // pred_fallthru
        _
    $region76: #{sentence_pair_classifier_forward.1} parent=5 // pred_fallthru
      _
  $region6: #{sentence_pair_classifier_forward.1} parent=0 // loop_footer
    %s24 = sadd.s32 1, %s20
  $region7: #{sentence_pair_classifier_forward.1} parent=0 // loop_footer_branch
    %19 = sbr.rel target = $region3
  $region8: #{sentence_pair_classifier_forward.1} parent=0 // loop_exit
    _

</llo_original>
